<compile_context>
chip_gen: v6e
topology: v6e:2x2x1
jax: 0.10.0
libtpu: 0.0.40
codegen_flags: <defaults>
</compile_context>

<pallas_src>
import functools

import jax
import jax.numpy as jnp
from jax.experimental import pallas as pl
from jax.experimental.pallas import tpu as pltpu


# ----------------------------------------------------------------------------
# Pallas kernel 1: 1x1 conv (input_proj) as a tiled matmul
# ----------------------------------------------------------------------------
def _conv1x1_kernel(x_ref, w_ref, b_ref, o_ref):
    # Input already bf16 from the backbone (half the HBM bytes of the dominant
    # stream); weights cast once per tile; f32 accumulation on the MXU.
    o_ref[...] = (
        jnp.dot(x_ref[...].astype(jnp.bfloat16),
                w_ref[...].astype(jnp.bfloat16),
                preferred_element_type=jnp.float32)
        + b_ref[...]
    ).astype(o_ref.dtype)


def conv1x1(x_rows, w, b, *, max_tile_rows=512):
    """1x1 conv over flattened pixels.  Output last dim (hidden) is a multiple
    of 128 -> lane-dense unmasked stores.  No wrapper-side pad/slice: the ragged
    edge block (if any) is handled by Pallas' masked edge-block store, so the
    activation tensor is read/written from HBM exactly once.
    max_tile_rows=512 is sized for v7x's 64 MiB VMEM (measured: 512->1024 buys
    ~1% of roofline); the tile is also capped so the grid has >= 2 steps to
    feed both v7x TensorCores via dimension_semantics=('parallel',)."""
    rows, cin = x_rows.shape
    cout = w.shape[1]
    half = ((pl.cdiv(rows, 2) + 7) // 8) * 8          # >=2 grid steps, sublane-aligned
    tile = max(8, min(max_tile_rows, half))
    grid = pl.cdiv(rows, tile)
    return pl.pallas_call(
        _conv1x1_kernel,
        out_shape=jax.ShapeDtypeStruct((rows, cout), jnp.float32),
        grid_spec=pltpu.PrefetchScalarGridSpec(
            num_scalar_prefetch=0,
            grid=(grid,),
            in_specs=[
                pl.BlockSpec((tile, cin), lambda i: (i, 0)),
                # TODO(synk): mark w/b with pipeline_mode=pl.Buffered(1) once the
                # toolchain accepts it on grid pallas_call (grid-invariant blocks
                # don't need a second buffer; only matters on v7x's 64 MiB VMEM).
                pl.BlockSpec((cin, cout), lambda i: (0, 0)),
                pl.BlockSpec((1, cout), lambda i: (0, 0)),
            ],
            out_specs=pl.BlockSpec((tile, cout), lambda i: (i, 0)),
        ),
        compiler_params=pltpu.CompilerParams(
            dimension_semantics=("parallel",),
            vmem_limit_bytes=32 * 1024 * 1024,
        ),
    )(x_rows, w, b)


# ----------------------------------------------------------------------------
# ParametricLIF dynamics (spikingjelly defaults: init_tau=2 -> sigmoid(w)=0.5,
# v_threshold=1.0, v_reset=0.0, decay_input=True, hard reset).
# TODO(synk): spikingjelly step_mode is ambiguous for a [L,T,B,Q,D] input; we
#             assume the membrane evolves along T and is independent per L.
# ----------------------------------------------------------------------------
def _plif_step(v, x, decay, v_th):
    v = v + (x - v) * decay
    s = (v >= v_th).astype(jnp.float32)   # heaviside spike
    return v * (1.0 - s), s               # hard reset to v_reset = 0


# ----------------------------------------------------------------------------
# Pallas kernel 2: FUSED class + bbox heads.
#   - hs (bf16) is read once per decoder layer (grid over L, no transpose)
#   - separate input PLIFs for class_embed / bbox_embed (distinct nn modules),
#     sharing the single per-timestep hs load
#   - per-timestep spikes stored into ONE reused (T*M, D) VMEM scratch
#   - matmuls phase-batched: M = T*B*Q rows (or B*Q for the temporal-mean ones)
#   - bias and 1/T applied once after the loop (affine commutes with mean)
#   - class logits + sigmoid(bbox) packed into a single 128-lane output slab
#   - PLIF decays / v_th arrive as runtime SMEM scalars (no recompile per value)
# ----------------------------------------------------------------------------
def _heads_kernel(scal_ref, hs_ref, wc_ref, bc_ref, w1_ref, b1_ref,
                  w2_ref, b2_ref, w3_ref, b3_ref, out_ref, spk_scr,
                  *, num_cls):
    dec_cls = scal_ref[0]     # class_embed input PLIF decay
    dec_box = scal_ref[1]     # bbox_embed input PLIF decay
    dec_h1 = scal_ref[2]      # bbox MLP hidden PLIF #1
    dec_h2 = scal_ref[3]      # bbox MLP hidden PLIF #2
    v_th = scal_ref[4]

    _, T, B, Q, D = hs_ref.shape
    M = B * Q
    P = wc_ref.shape[1]
    inv_t = 1.0 / T

    # ---- phase 1: input PLIFs over T (elementwise, VPU only) ---------------
    # hs block read once per timestep; bbox-path spikes go straight into the
    # VMEM scratch (no concatenate copy, one-timestep working set).
    v_c = jnp.zeros((M, D), jnp.float32)
    v_b = jnp.zeros((M, D), jnp.float32)
    s_c_sum = jnp.zeros((M, D), jnp.float32)
    for t in range(T):                      # T small & static -> unrolled
        x = hs_ref[0, t].reshape(M, D).astype(jnp.float32)
        v_c, s_c = _plif_step(v_c, x, dec_cls, v_th)
        s_c_sum = s_c_sum + s_c
        v_b, s_b = _plif_step(v_b, x, dec_box, v_th)
        spk_scr[t * M:(t + 1) * M, :] = s_b

    # ---- class head: mean_T(s @ Wc + bc) == (sum_T s / T) @ Wc + bc --------
    logits = jnp.dot((s_c_sum * inv_t).astype(jnp.bfloat16),
                     wc_ref[...].astype(jnp.bfloat16),
                     preferred_element_type=jnp.float32) + bc_ref[...]

    # ---- bbox head: Linear -> PLIF -> Linear -> PLIF -> Linear -------------
    # layer 1, one batched matmul over all time steps (T*M rows)
    h1 = jnp.dot(spk_scr[...].astype(jnp.bfloat16),
                 w1_ref[...].astype(jnp.bfloat16),
                 preferred_element_type=jnp.float32) + b1_ref[...]
    v1 = jnp.zeros((M, D), jnp.float32)
    for t in range(T):
        v1, s1 = _plif_step(v1, h1[t * M:(t + 1) * M, :], dec_h1, v_th)
        spk_scr[t * M:(t + 1) * M, :] = s1     # reuse scratch (h1 is a value)

    # layer 2, batched matmul
    h2 = jnp.dot(spk_scr[...].astype(jnp.bfloat16),
                 w2_ref[...].astype(jnp.bfloat16),
                 preferred_element_type=jnp.float32) + b2_ref[...]
    v2 = jnp.zeros((M, D), jnp.float32)
    s2_sum = jnp.zeros((M, D), jnp.float32)
    for t in range(T):
        v2, s2 = _plif_step(v2, h2[t * M:(t + 1) * M, :], dec_h2, v_th)
        s2_sum = s2_sum + s2

    # final layer on temporal-mean spikes, then sigmoid (matches
    # `self.bbox_embed(hs).mean(dim=1).sigmoid()`)
    box = jnp.dot((s2_sum * inv_t).astype(jnp.bfloat16),
                  w3_ref[...].astype(jnp.bfloat16),
                  preferred_element_type=jnp.float32) + b3_ref[...]

    # ---- pack both heads into ONE lane-dense slab ---------------------------
    # lanes [0, num_cls)  = class logits
    # lanes [num_cls, P)  = sigmoid of the bbox path (bbox in [num_cls, num_cls+4))
    lane = jax.lax.broadcasted_iota(jnp.int32, (M, P), 1)
    out_ref[0] = jnp.where(lane < num_cls, logits,
                           jax.nn.sigmoid(box)).astype(out_ref.dtype)


def detr_heads(hs, params):
    """Fused class + bbox heads. hs: [L,T,B,Q,D] bf16 (no transpose needed).
    Returns (logits [L,B,Q,C1], boxes [L,B,Q,4])."""
    L, T, B, Q, D = hs.shape
    M = B * Q
    C1 = params["class_w"].shape[1]
    C4 = params["bbox_w3"].shape[1]
    P = ((C1 + C4 + 127) // 128) * 128          # one packed lane-dense slab

    f32 = jnp.float32
    wc = jnp.zeros((D, P), f32).at[:, :C1].set(params["class_w"])
    bc = jnp.zeros((P,), f32).at[:C1].set(params["class_b"])
    w3 = jnp.zeros((D, P), f32).at[:, C1:C1 + C4].set(params["bbox_w3"])
    b3 = jnp.zeros((P,), f32).at[C1:C1 + C4].set(params["bbox_b3"])

    decays = jax.nn.sigmoid(params["plif_w"])   # learnable tau -> decay, (4,)
    scal = jnp.concatenate([decays, jnp.array([params["v_threshold"]], f32)])

    packed = pl.pallas_call(
        functools.partial(_heads_kernel, num_cls=C1),
        out_shape=jax.ShapeDtypeStruct((L, M, P), jnp.float32),
        grid_spec=pltpu.PrefetchScalarGridSpec(
            num_scalar_prefetch=0,
            grid=(L,),
            in_specs=[
                pl.BlockSpec(memory_space=pltpu.MemorySpace.SMEM),   # decays/v_th
                pl.BlockSpec((1, T, B, Q, D), lambda l: (l, 0, 0, 0, 0)),
                # TODO(synk): weight/bias blocks are grid-invariant; mark them
                # pipeline_mode=pl.Buffered(1) when supported to skip the unused
                # second buffer (only matters for v7x VMEM headroom).
                pl.BlockSpec((D, P), lambda l: (0, 0)),
                pl.BlockSpec((1, P), lambda l: (0, 0)),
                pl.BlockSpec((D, D), lambda l: (0, 0)),
                pl.BlockSpec((1, D), lambda l: (0, 0)),
                pl.BlockSpec((D, D), lambda l: (0, 0)),
                pl.BlockSpec((1, D), lambda l: (0, 0)),
                pl.BlockSpec((D, P), lambda l: (0, 0)),
                pl.BlockSpec((1, P), lambda l: (0, 0)),
            ],
            out_specs=pl.BlockSpec((1, M, P), lambda l: (l, 0, 0)),
            scratch_shapes=[pltpu.VMEM((T * M, D), jnp.float32)],
        ),
        compiler_params=pltpu.CompilerParams(
            dimension_semantics=("parallel",),
            vmem_limit_bytes=28 * 1024 * 1024,
        ),
    )(scal, hs,
      wc, bc[None, :],
      params["bbox_w1"], params["bbox_b1"][None, :],
      params["bbox_w2"], params["bbox_b2"][None, :],
      w3, b3[None, :])

    cls = packed[:, :, :C1].reshape(L, B, Q, C1)
    box = packed[:, :, C1:C1 + C4].reshape(L, B, Q, C4)
    return cls, box


# ----------------------------------------------------------------------------
# Deterministic stand-ins for external dependencies (backbone / transformer).
# TODO(synk): the real ResNet backbone and spiking transformer are external
#             modules not given in the source; replaced by deterministic
#             plain-JAX stand-ins producing correctly-shaped features / hs.
# ----------------------------------------------------------------------------
def backbone_forward(params, images, mask):
    # images: [T, B, 3, H, W] (NCHW like torch) -> features [T, B, H/2, W/2, Cb]
    T, B, C, H, W = images.shape
    x = images.reshape(T, B, C, H // 2, 2, W // 2, 2).mean(axis=(4, 6))   # avg-pool x2
    x = jnp.transpose(x, (0, 1, 3, 4, 2))                                  # channels-last
    feat = jnp.einsum("tbhwc,cd->tbhwd", x, params["backbone_w"]) + params["backbone_b"]
    feat = feat.astype(jnp.bfloat16)            # bf16 activations into input_proj
    mask_ds = mask[:, ::2, ::2]

    # deterministic sin/cos positional encoding with D channels
    D = params["input_proj_w"].shape[1]
    H2, W2 = H // 2, W // 2
    d4 = D // 4
    omega = 1.0 / (100.0 ** (jnp.arange(d4, dtype=jnp.float32) / d4))
    ys = jnp.arange(H2, dtype=jnp.float32)[:, None, None] * omega          # [H2,1,d4]
    xs = jnp.arange(W2, dtype=jnp.float32)[None, :, None] * omega          # [1,W2,d4]
    ys = jnp.broadcast_to(ys, (H2, W2, d4))
    xs = jnp.broadcast_to(xs, (H2, W2, d4))
    pos = jnp.concatenate([jnp.sin(ys), jnp.cos(ys), jnp.sin(xs), jnp.cos(xs)], axis=-1)
    return feat, mask_ds, pos                                              # pos: [H2,W2,D]


def transformer_forward(params, memory, mask, query_embed, pos):
    # memory: [T, B, H2, W2, D] channels-last; returns hs: [L, T, B, Q, D] bf16
    T, B, H2, W2, D = memory.shape
    mem = (memory + pos[None, None]).reshape(T, B, H2 * W2, D)
    valid = 1.0 - mask.reshape(1, B, H2 * W2, 1)
    pooled = (mem * valid).sum(axis=2) / jnp.maximum(valid.sum(axis=2), 1.0)  # [T,B,D]
    hs0 = query_embed[None, None] + pooled[:, :, None, :]                     # [T,B,Q,D]
    h = hs0
    layers = []
    for l in range(params["dec_w"].shape[0]):
        h = jnp.tanh(jnp.einsum("tbqd,de->tbqe", h, params["dec_w"][l])) + hs0
        layers.append(h)
    # bf16 hs: halves the per-layer HBM read and the hs double-buffer in the
    # heads kernel; membranes / sums stay f32 inside the kernel.
    return jnp.stack(layers, axis=0).astype(jnp.bfloat16)                     # [L,T,B,Q,D]


# ----------------------------------------------------------------------------
# Full SpikingDETR forward
# ----------------------------------------------------------------------------
def spiking_detr_forward(params, images, mask):
    feat, mask_ds, pos = backbone_forward(params, images, mask)   # [T,B,H2,W2,Cb] bf16
    T, B, H2, W2, Cb = feat.shape
    D = params["input_proj_w"].shape[1]

    # input_proj: 1x1 conv as Pallas matmul over flattened pixels (bf16 in, f32 out)
    rows = feat.reshape(T * B * H2 * W2, Cb)
    proj = conv1x1(rows, params["input_proj_w"], params["input_proj_b"][None, :])
    memory = proj.reshape(T, B, H2, W2, D)

    hs = transformer_forward(params, memory, mask_ds, params["query_embed"], pos)

    # fused class + bbox heads (single pallas_call, hs read once per layer)
    outputs_class, outputs_coord = detr_heads(hs, params)  # [L,B,Q,C1], [L,B,Q,4]
    return {"pred_logits": outputs_class[-1], "pred_boxes": outputs_coord[-1]}


def init_params(key, *, cb=8, hidden=128, num_queries=8, num_classes=3, num_dec_layers=2):
    ks = jax.random.split(key, 16)
    n = lambda k, shape, s=1.0: (jax.random.normal(k, shape, jnp.float32) * s)
    return {
        "backbone_w": n(ks[0], (3, cb), 0.5),
        "backbone_b": n(ks[1], (cb,), 0.1),
        "input_proj_w": n(ks[2], (cb, hidden), 1.0 / (cb ** 0.5)),
        "input_proj_b": n(ks[3], (hidden,), 0.1),
        "query_embed": n(ks[4], (num_queries, hidden), 1.0),
        "dec_w": n(ks[5], (num_dec_layers, hidden, hidden), 1.0 / (hidden ** 0.5)),
        "class_w": n(ks[6], (hidden, num_classes + 1), 1.0 / (hidden ** 0.5)),
        "class_b": n(ks[7], (num_classes + 1,), 0.1),
        "bbox_w1": n(ks[8], (hidden, hidden), 1.0 / (hidden ** 0.5)),
        "bbox_b1": n(ks[9], (hidden,), 0.1),
        "bbox_w2": n(ks[10], (hidden, hidden), 1.0 / (hidden ** 0.5)),
        "bbox_b2": n(ks[11], (hidden,), 0.1),
        "bbox_w3": n(ks[12], (hidden, 4), 1.0 / (hidden ** 0.5)),
        "bbox_b3": n(ks[13], (4,), 0.1),
        # ParametricLIF raw weights: [class input, bbox input, bbox hidden1, bbox hidden2]
        # (init_tau=2 -> w=0 -> decay=sigmoid(0)=0.5)
        "plif_w": jnp.zeros((4,), jnp.float32),
        "v_threshold": jnp.float32(1.0),
    }


if __name__ == "__main__":
    T, B, H, W = 4, 2, 16, 16
    NUM_QUERIES, NUM_CLASSES, HIDDEN = 8, 3, 128

    root = jax.random.PRNGKey(0)
    k_params, k_img = jax.random.split(root)
    params = init_params(k_params, cb=8, hidden=HIDDEN,
                         num_queries=NUM_QUERIES, num_classes=NUM_CLASSES,
                         num_dec_layers=2)

    images = jax.random.normal(k_img, (T, B, 3, H, W), jnp.float32)  # samples.tensor
    mask = jnp.zeros((B, H, W), jnp.float32)                         # samples.mask

    out = jax.jit(spiking_detr_forward)(params, images, mask)
    jax.block_until_ready(out)

    assert out["pred_logits"].shape == (B, NUM_QUERIES, NUM_CLASSES + 1)
    assert out["pred_boxes"].shape == (B, NUM_QUERIES, 4)
    assert bool(jnp.all((out["pred_boxes"] >= 0.0) & (out["pred_boxes"] <= 1.0)))
    print("KERNEL_OK")
</pallas_src>

<mosaic_0001>
module attributes {stable_mosaic.version = 11 : i64} {
  func.func @_conv1x1_kernel(%arg0: i32, %arg1: memref<256x8xbf16, #tpu.memory_space<vmem>>, %arg2: memref<8x128xf32, #tpu.memory_space<vmem>>, %arg3: memref<1x128xf32, #tpu.memory_space<vmem>>, %arg4: memref<256x128xf32, #tpu.memory_space<vmem>>) attributes {dimension_semantics = [#tpu.dimension_semantics<parallel>], iteration_bounds = array<i64: 2>, scalar_prefetch = 0 : i64, scratch_operands = 0 : i64, tpu.core_type = #tpu.core_type<tc>, window_params = [{transform_indices = @transform_0, window_bounds = array<i64: 256, 8>}, {pipeline_mode = #tpu.pipeline_mode<synchronous>, transform_indices = @transform_1, window_bounds = array<i64: 8, 128>}, {pipeline_mode = #tpu.pipeline_mode<synchronous>, transform_indices = @transform_2, window_bounds = array<i64: 1, 128>}, {transform_indices = @transform_3, window_bounds = array<i64: 256, 128>}]} {
    %c0 = arith.constant 0 : index
    %c0_0 = arith.constant 0 : index
    %0 = vector.load %arg1[%c0, %c0_0] : memref<256x8xbf16, #tpu.memory_space<vmem>>, vector<256x8xbf16>
    %c0_1 = arith.constant 0 : index
    %c0_2 = arith.constant 0 : index
    %1 = vector.load %arg2[%c0_1, %c0_2] : memref<8x128xf32, #tpu.memory_space<vmem>>, vector<8x128xf32>
    %2 = arith.truncf %1 : vector<8x128xf32> to vector<8x128xbf16>
    %cst = arith.constant dense<0.000000e+00> : vector<256x128xf32>
    %3 = tpu.matmul %0, %2, %cst {dimension_numbers = #tpu.dot_dimension_numbers<[1], [0], [0], [1], [0, 0, 1, 1], [], []>} : vector<256x8xbf16>, vector<8x128xbf16>, vector<256x128xf32> -> vector<256x128xf32>
    %c0_3 = arith.constant 0 : index
    %c0_4 = arith.constant 0 : index
    %4 = vector.load %arg3[%c0_3, %c0_4] : memref<1x128xf32, #tpu.memory_space<vmem>>, vector<1x128xf32>
    %5 = vector.broadcast %4 : vector<1x128xf32> to vector<256x128xf32>
    %6 = arith.addf %3, %5 : vector<256x128xf32>
    %c0_5 = arith.constant 0 : index
    %c0_6 = arith.constant 0 : index
    %7 = vector.load %arg4[%c0_5, %c0_6] : memref<256x128xf32, #tpu.memory_space<vmem>>, vector<256x128xf32>
    tpu.vector_store %arg4[%c0_5, %c0_6], %6 {strides = array<i32>} : memref<256x128xf32, #tpu.memory_space<vmem>>, vector<256x128xf32>,
    return
  }
  func.func @transform_0(%arg0: i32) -> (i32, i32) {
    %c0_i32 = arith.constant 0 : i32
    %c0_i32_0 = arith.constant 0 : i32
    return %arg0, %c0_i32 : i32, i32
  }
  func.func @transform_1(%arg0: i32) -> (i32, i32) {
    %c0_i32 = arith.constant 0 : i32
    %c0_i32_0 = arith.constant 0 : i32
    %c0_i32_1 = arith.constant 0 : i32
    return %c0_i32, %c0_i32_0 : i32, i32
  }
  func.func @transform_2(%arg0: i32) -> (i32, i32) {
    %c0_i32 = arith.constant 0 : i32
    %c0_i32_0 = arith.constant 0 : i32
    %c0_i32_1 = arith.constant 0 : i32
    return %c0_i32, %c0_i32_0 : i32, i32
  }
  func.func @transform_3(%arg0: i32) -> (i32, i32) {
    %c0_i32 = arith.constant 0 : i32
    %c0_i32_0 = arith.constant 0 : i32
    return %arg0, %c0_i32 : i32, i32
  }
}

module attributes {stable_mosaic.version = 11 : i64} {
  func.func @_heads_kernel(%arg0: i32, %arg1: memref<5xf32, #tpu.memory_space<smem>>, %arg2: memref<1x4x2x8x128xbf16, #tpu.memory_space<vmem>>, %arg3: memref<128x128xf32, #tpu.memory_space<vmem>>, %arg4: memref<1x128xf32, #tpu.memory_space<vmem>>, %arg5: memref<128x128xf32, #tpu.memory_space<vmem>>, %arg6: memref<1x128xf32, #tpu.memory_space<vmem>>, %arg7: memref<128x128xf32, #tpu.memory_space<vmem>>, %arg8: memref<1x128xf32, #tpu.memory_space<vmem>>, %arg9: memref<128x128xf32, #tpu.memory_space<vmem>>, %arg10: memref<1x128xf32, #tpu.memory_space<vmem>>, %arg11: memref<1x16x128xf32, #tpu.memory_space<vmem>>, %arg12: memref<64x128xf32, #tpu.memory_space<vmem>>) attributes {dimension_semantics = [#tpu.dimension_semantics<parallel>], iteration_bounds = array<i64: 2>, scalar_prefetch = 0 : i64, scratch_operands = 1 : i64, tpu.core_type = #tpu.core_type<tc>, window_params = [{transform_indices = @transform_0, window_bounds = array<i64: 5>}, {transform_indices = @transform_1, window_bounds = array<i64: 1, 4, 2, 8, 128>}, {pipeline_mode = #tpu.pipeline_mode<synchronous>, transform_indices = @transform_2, window_bounds = array<i64: 128, 128>}, {pipeline_mode = #tpu.pipeline_mode<synchronous>, transform_indices = @transform_3, window_bounds = array<i64: 1, 128>}, {pipeline_mode = #tpu.pipeline_mode<synchronous>, transform_indices = @transform_4, window_bounds = array<i64: 128, 128>}, {pipeline_mode = #tpu.pipeline_mode<synchronous>, transform_indices = @transform_5, window_bounds = array<i64: 1, 128>}, {pipeline_mode = #tpu.pipeline_mode<synchronous>, transform_indices = @transform_6, window_bounds = array<i64: 128, 128>}, {pipeline_mode = #tpu.pipeline_mode<synchronous>, transform_indices = @transform_7, window_bounds = array<i64: 1, 128>}, {pipeline_mode = #tpu.pipeline_mode<synchronous>, transform_indices = @transform_8, window_bounds = array<i64: 128, 128>}, {pipeline_mode = #tpu.pipeline_mode<synchronous>, transform_indices = @transform_9, window_bounds = array<i64: 1, 128>}, {transform_indices = @transform_10, window_bounds = array<i64: 1, 16, 128>}]} {
    %c0 = arith.constant 0 : index
    %0 = memref.load %arg1[%c0] : memref<5xf32, #tpu.memory_space<smem>>
    %c1 = arith.constant 1 : index
    %1 = memref.load %arg1[%c1] : memref<5xf32, #tpu.memory_space<smem>>
    %c2 = arith.constant 2 : index
    %2 = memref.load %arg1[%c2] : memref<5xf32, #tpu.memory_space<smem>>
    %c3 = arith.constant 3 : index
    %3 = memref.load %arg1[%c3] : memref<5xf32, #tpu.memory_space<smem>>
    %c4 = arith.constant 4 : index
    %4 = memref.load %arg1[%c4] : memref<5xf32, #tpu.memory_space<smem>>
    %cst = arith.constant 0.000000e+00 : f32
    %5 = vector.broadcast %cst : f32 to vector<16x128xf32>
    %cst_0 = arith.constant 0.000000e+00 : f32
    %6 = vector.broadcast %cst_0 : f32 to vector<16x128xf32>
    %cst_1 = arith.constant 0.000000e+00 : f32
    %7 = vector.broadcast %cst_1 : f32 to vector<16x128xf32>
    %c0_2 = arith.constant 0 : index
    %c0_3 = arith.constant 0 : index
    %c0_4 = arith.constant 0 : index
    %c0_5 = arith.constant 0 : index
    %c0_6 = arith.constant 0 : index
    %8 = vector.load %arg2[%c0_2, %c0_3, %c0_4, %c0_5, %c0_6] : memref<1x4x2x8x128xbf16, #tpu.memory_space<vmem>>, vector<1x1x2x8x128xbf16>
    %9 = vector.shape_cast %8 : vector<1x1x2x8x128xbf16> to vector<2x8x128xbf16>
    %10 = vector.shape_cast %9 : vector<2x8x128xbf16> to vector<16x128xbf16>
    %11 = arith.extf %10 : vector<16x128xbf16> to vector<16x128xf32>
    %12 = arith.subf %11, %5 : vector<16x128xf32>
    %13 = vector.broadcast %0 : f32 to vector<16x128xf32>
    %14 = arith.mulf %12, %13 : vector<16x128xf32>
    %15 = arith.addf %5, %14 : vector<16x128xf32>
    %16 = vector.broadcast %4 : f32 to vector<16x128xf32>
    %17 = arith.cmpf oge, %15, %16 : vector<16x128xf32>
    %18 = arith.extui %17 : vector<16x128xi1> to vector<16x128xi32>
    %19 = arith.sitofp %18 : vector<16x128xi32> to vector<16x128xf32>
    %cst_7 = arith.constant 1.000000e+00 : f32
    %20 = vector.broadcast %cst_7 : f32 to vector<16x128xf32>
    %21 = arith.subf %20, %19 : vector<16x128xf32>
    %22 = arith.mulf %15, %21 : vector<16x128xf32>
    %23 = arith.addf %7, %19 : vector<16x128xf32>
    %24 = arith.subf %11, %6 : vector<16x128xf32>
    %25 = vector.broadcast %1 : f32 to vector<16x128xf32>
    %26 = arith.mulf %24, %25 : vector<16x128xf32>
    %27 = arith.addf %6, %26 : vector<16x128xf32>
    %28 = vector.broadcast %4 : f32 to vector<16x128xf32>
    %29 = arith.cmpf oge, %27, %28 : vector<16x128xf32>
    %30 = arith.extui %29 : vector<16x128xi1> to vector<16x128xi32>
    %31 = arith.sitofp %30 : vector<16x128xi32> to vector<16x128xf32>
    %cst_8 = arith.constant 1.000000e+00 : f32
    %32 = vector.broadcast %cst_8 : f32 to vector<16x128xf32>
    %33 = arith.subf %32, %31 : vector<16x128xf32>
    %34 = arith.mulf %27, %33 : vector<16x128xf32>
    %c0_9 = arith.constant 0 : index
    %c0_10 = arith.constant 0 : index
    %35 = vector.load %arg12[%c0_9, %c0_10] : memref<64x128xf32, #tpu.memory_space<vmem>>, vector<16x128xf32>
    tpu.vector_store %arg12[%c0_9, %c0_10], %31 {strides = array<i32>} : memref<64x128xf32, #tpu.memory_space<vmem>>, vector<16x128xf32>,
    %c0_11 = arith.constant 0 : index
    %c1_12 = arith.constant 1 : index
    %c0_13 = arith.constant 0 : index
    %c0_14 = arith.constant 0 : index
    %c0_15 = arith.constant 0 : index
    %36 = vector.load %arg2[%c0_11, %c1_12, %c0_13, %c0_14, %c0_15] : memref<1x4x2x8x128xbf16, #tpu.memory_space<vmem>>, vector<1x1x2x8x128xbf16>
    %37 = vector.shape_cast %36 : vector<1x1x2x8x128xbf16> to vector<2x8x128xbf16>
    %38 = vector.shape_cast %37 : vector<2x8x128xbf16> to vector<16x128xbf16>
    %39 = arith.extf %38 : vector<16x128xbf16> to vector<16x128xf32>
    %40 = arith.subf %39, %22 : vector<16x128xf32>
    %41 = vector.broadcast %0 : f32 to vector<16x128xf32>
    %42 = arith.mulf %40, %41 : vector<16x128xf32>
    %43 = arith.addf %22, %42 : vector<16x128xf32>
    %44 = vector.broadcast %4 : f32 to vector<16x128xf32>
    %45 = arith.cmpf oge, %43, %44 : vector<16x128xf32>
    %46 = arith.extui %45 : vector<16x128xi1> to vector<16x128xi32>
    %47 = arith.sitofp %46 : vector<16x128xi32> to vector<16x128xf32>
    %cst_16 = arith.constant 1.000000e+00 : f32
    %48 = vector.broadcast %cst_16 : f32 to vector<16x128xf32>
    %49 = arith.subf %48, %47 : vector<16x128xf32>
    %50 = arith.mulf %43, %49 : vector<16x128xf32>
    %51 = arith.addf %23, %47 : vector<16x128xf32>
    %52 = arith.subf %39, %34 : vector<16x128xf32>
    %53 = vector.broadcast %1 : f32 to vector<16x128xf32>
    %54 = arith.mulf %52, %53 : vector<16x128xf32>
    %55 = arith.addf %34, %54 : vector<16x128xf32>
    %56 = vector.broadcast %4 : f32 to vector<16x128xf32>
    %57 = arith.cmpf oge, %55, %56 : vector<16x128xf32>
    %58 = arith.extui %57 : vector<16x128xi1> to vector<16x128xi32>
    %59 = arith.sitofp %58 : vector<16x128xi32> to vector<16x128xf32>
    %cst_17 = arith.constant 1.000000e+00 : f32
    %60 = vector.broadcast %cst_17 : f32 to vector<16x128xf32>
    %61 = arith.subf %60, %59 : vector<16x128xf32>
    %62 = arith.mulf %55, %61 : vector<16x128xf32>
    %c16 = arith.constant 16 : index
    %c0_18 = arith.constant 0 : index
    %63 = vector.load %arg12[%c16, %c0_18] : memref<64x128xf32, #tpu.memory_space<vmem>>, vector<16x128xf32>
    tpu.vector_store %arg12[%c16, %c0_18], %59 {strides = array<i32>} : memref<64x128xf32, #tpu.memory_space<vmem>>, vector<16x128xf32>,
    %c0_19 = arith.constant 0 : index
    %c2_20 = arith.constant 2 : index
    %c0_21 = arith.constant 0 : index
    %c0_22 = arith.constant 0 : index
    %c0_23 = arith.constant 0 : index
    %64 = vector.load %arg2[%c0_19, %c2_20, %c0_21, %c0_22, %c0_23] : memref<1x4x2x8x128xbf16, #tpu.memory_space<vmem>>, vector<1x1x2x8x128xbf16>
    %65 = vector.shape_cast %64 : vector<1x1x2x8x128xbf16> to vector<2x8x128xbf16>
    %66 = vector.shape_cast %65 : vector<2x8x128xbf16> to vector<16x128xbf16>
    %67 = arith.extf %66 : vector<16x128xbf16> to vector<16x128xf32>
    %68 = arith.subf %67, %50 : vector<16x128xf32>
    %69 = vector.broadcast %0 : f32 to vector<16x128xf32>
    %70 = arith.mulf %68, %69 : vector<16x128xf32>
    %71 = arith.addf %50, %70 : vector<16x128xf32>
    %72 = vector.broadcast %4 : f32 to vector<16x128xf32>
    %73 = arith.cmpf oge, %71, %72 : vector<16x128xf32>
    %74 = arith.extui %73 : vector<16x128xi1> to vector<16x128xi32>
    %75 = arith.sitofp %74 : vector<16x128xi32> to vector<16x128xf32>
    %cst_24 = arith.constant 1.000000e+00 : f32
    %76 = vector.broadcast %cst_24 : f32 to vector<16x128xf32>
    %77 = arith.subf %76, %75 : vector<16x128xf32>
    %78 = arith.mulf %71, %77 : vector<16x128xf32>
    %79 = arith.addf %51, %75 : vector<16x128xf32>
    %80 = arith.subf %67, %62 : vector<16x128xf32>
    %81 = vector.broadcast %1 : f32 to vector<16x128xf32>
    %82 = arith.mulf %80, %81 : vector<16x128xf32>
    %83 = arith.addf %62, %82 : vector<16x128xf32>
    %84 = vector.broadcast %4 : f32 to vector<16x128xf32>
    %85 = arith.cmpf oge, %83, %84 : vector<16x128xf32>
    %86 = arith.extui %85 : vector<16x128xi1> to vector<16x128xi32>
    %87 = arith.sitofp %86 : vector<16x128xi32> to vector<16x128xf32>
    %cst_25 = arith.constant 1.000000e+00 : f32
    %88 = vector.broadcast %cst_25 : f32 to vector<16x128xf32>
    %89 = arith.subf %88, %87 : vector<16x128xf32>
    %90 = arith.mulf %83, %89 : vector<16x128xf32>
    %c32 = arith.constant 32 : index
    %c0_26 = arith.constant 0 : index
    %91 = vector.load %arg12[%c32, %c0_26] : memref<64x128xf32, #tpu.memory_space<vmem>>, vector<16x128xf32>
    tpu.vector_store %arg12[%c32, %c0_26], %87 {strides = array<i32>} : memref<64x128xf32, #tpu.memory_space<vmem>>, vector<16x128xf32>,
    %c0_27 = arith.constant 0 : index
    %c3_28 = arith.constant 3 : index
    %c0_29 = arith.constant 0 : index
    %c0_30 = arith.constant 0 : index
    %c0_31 = arith.constant 0 : index
    %92 = vector.load %arg2[%c0_27, %c3_28, %c0_29, %c0_30, %c0_31] : memref<1x4x2x8x128xbf16, #tpu.memory_space<vmem>>, vector<1x1x2x8x128xbf16>
    %93 = vector.shape_cast %92 : vector<1x1x2x8x128xbf16> to vector<2x8x128xbf16>
    %94 = vector.shape_cast %93 : vector<2x8x128xbf16> to vector<16x128xbf16>
    %95 = arith.extf %94 : vector<16x128xbf16> to vector<16x128xf32>
    %96 = arith.subf %95, %78 : vector<16x128xf32>
    %97 = vector.broadcast %0 : f32 to vector<16x128xf32>
    %98 = arith.mulf %96, %97 : vector<16x128xf32>
    %99 = arith.addf %78, %98 : vector<16x128xf32>
    %100 = vector.broadcast %4 : f32 to vector<16x128xf32>
    %101 = arith.cmpf oge, %99, %100 : vector<16x128xf32>
    %102 = arith.extui %101 : vector<16x128xi1> to vector<16x128xi32>
    %103 = arith.sitofp %102 : vector<16x128xi32> to vector<16x128xf32>
    %104 = arith.addf %79, %103 : vector<16x128xf32>
    %105 = arith.subf %95, %90 : vector<16x128xf32>
    %106 = vector.broadcast %1 : f32 to vector<16x128xf32>
    %107 = arith.mulf %105, %106 : vector<16x128xf32>
    %108 = arith.addf %90, %107 : vector<16x128xf32>
    %109 = vector.broadcast %4 : f32 to vector<16x128xf32>
    %110 = arith.cmpf oge, %108, %109 : vector<16x128xf32>
    %111 = arith.extui %110 : vector<16x128xi1> to vector<16x128xi32>
    %112 = arith.sitofp %111 : vector<16x128xi32> to vector<16x128xf32>
    %c48 = arith.constant 48 : index
    %c0_32 = arith.constant 0 : index
    %113 = vector.load %arg12[%c48, %c0_32] : memref<64x128xf32, #tpu.memory_space<vmem>>, vector<16x128xf32>
    tpu.vector_store %arg12[%c48, %c0_32], %112 {strides = array<i32>} : memref<64x128xf32, #tpu.memory_space<vmem>>, vector<16x128xf32>,
    %cst_33 = arith.constant 2.500000e-01 : f32
    %114 = vector.broadcast %cst_33 : f32 to vector<16x128xf32>
    %115 = arith.mulf %104, %114 : vector<16x128xf32>
    %116 = arith.truncf %115 : vector<16x128xf32> to vector<16x128xbf16>
    %c0_34 = arith.constant 0 : index
    %c0_35 = arith.constant 0 : index
    %117 = vector.load %arg3[%c0_34, %c0_35] : memref<128x128xf32, #tpu.memory_space<vmem>>, vector<128x128xf32>
    %118 = arith.truncf %117 : vector<128x128xf32> to vector<128x128xbf16>
    %cst_36 = arith.constant dense<0.000000e+00> : vector<16x128xf32>
    %119 = tpu.matmul %116, %118, %cst_36 {dimension_numbers = #tpu.dot_dimension_numbers<[1], [0], [0], [1], [0, 0, 1, 1], [], []>} : vector<16x128xbf16>, vector<128x128xbf16>, vector<16x128xf32> -> vector<16x128xf32>
    %c0_37 = arith.constant 0 : index
    %c0_38 = arith.constant 0 : index
    %120 = vector.load %arg4[%c0_37, %c0_38] : memref<1x128xf32, #tpu.memory_space<vmem>>, vector<1x128xf32>
    %121 = vector.broadcast %120 : vector<1x128xf32> to vector<16x128xf32>
    %122 = arith.addf %119, %121 : vector<16x128xf32>
    %c0_39 = arith.constant 0 : index
    %c0_40 = arith.constant 0 : index
    %123 = vector.load %arg12[%c0_39, %c0_40] : memref<64x128xf32, #tpu.memory_space<vmem>>, vector<64x128xf32>
    %124 = arith.truncf %123 : vector<64x128xf32> to vector<64x128xbf16>
    %c0_41 = arith.constant 0 : index
    %c0_42 = arith.constant 0 : index
    %125 = vector.load %arg5[%c0_41, %c0_42] : memref<128x128xf32, #tpu.memory_space<vmem>>, vector<128x128xf32>
    %126 = arith.truncf %125 : vector<128x128xf32> to vector<128x128xbf16>
    %cst_43 = arith.constant dense<0.000000e+00> : vector<64x128xf32>
    %127 = tpu.matmul %124, %126, %cst_43 {dimension_numbers = #tpu.dot_dimension_numbers<[1], [0], [0], [1], [0, 0, 1, 1], [], []>} : vector<64x128xbf16>, vector<128x128xbf16>, vector<64x128xf32> -> vector<64x128xf32>
    %c0_44 = arith.constant 0 : index
    %c0_45 = arith.constant 0 : index
    %128 = vector.load %arg6[%c0_44, %c0_45] : memref<1x128xf32, #tpu.memory_space<vmem>>, vector<1x128xf32>
    %129 = vector.broadcast %128 : vector<1x128xf32> to vector<64x128xf32>
    %130 = arith.addf %127, %129 : vector<64x128xf32>
    %cst_46 = arith.constant 0.000000e+00 : f32
    %131 = vector.broadcast %cst_46 : f32 to vector<16x128xf32>
    %132 = vector.extract_strided_slice %130 {offsets = [0, 0], sizes = [16, 128], strides = [1, 1]} : vector<64x128xf32> to vector<16x128xf32>
    %133 = arith.subf %132, %131 : vector<16x128xf32>
    %134 = vector.broadcast %2 : f32 to vector<16x128xf32>
    %135 = arith.mulf %133, %134 : vector<16x128xf32>
    %136 = arith.addf %131, %135 : vector<16x128xf32>
    %137 = vector.broadcast %4 : f32 to vector<16x128xf32>
    %138 = arith.cmpf oge, %136, %137 : vector<16x128xf32>
    %139 = arith.extui %138 : vector<16x128xi1> to vector<16x128xi32>
    %140 = arith.sitofp %139 : vector<16x128xi32> to vector<16x128xf32>
    %cst_47 = arith.constant 1.000000e+00 : f32
    %141 = vector.broadcast %cst_47 : f32 to vector<16x128xf32>
    %142 = arith.subf %141, %140 : vector<16x128xf32>
    %143 = arith.mulf %136, %142 : vector<16x128xf32>
    %c0_48 = arith.constant 0 : index
    %c0_49 = arith.constant 0 : index
    %144 = vector.load %arg12[%c0_48, %c0_49] : memref<64x128xf32, #tpu.memory_space<vmem>>, vector<16x128xf32>
    tpu.vector_store %arg12[%c0_48, %c0_49], %140 {strides = array<i32>} : memref<64x128xf32, #tpu.memory_space<vmem>>, vector<16x128xf32>,
    %145 = vector.extract_strided_slice %130 {offsets = [16, 0], sizes = [16, 128], strides = [1, 1]} : vector<64x128xf32> to vector<16x128xf32>
    %146 = arith.subf %145, %143 : vector<16x128xf32>
    %147 = vector.broadcast %2 : f32 to vector<16x128xf32>
    %148 = arith.mulf %146, %147 : vector<16x128xf32>
    %149 = arith.addf %143, %148 : vector<16x128xf32>
    %150 = vector.broadcast %4 : f32 to vector<16x128xf32>
    %151 = arith.cmpf oge, %149, %150 : vector<16x128xf32>
    %152 = arith.extui %151 : vector<16x128xi1> to vector<16x128xi32>
    %153 = arith.sitofp %152 : vector<16x128xi32> to vector<16x128xf32>
    %cst_50 = arith.constant 1.000000e+00 : f32
    %154 = vector.broadcast %cst_50 : f32 to vector<16x128xf32>
    %155 = arith.subf %154, %153 : vector<16x128xf32>
    %156 = arith.mulf %149, %155 : vector<16x128xf32>
    %c16_51 = arith.constant 16 : index
    %c0_52 = arith.constant 0 : index
    %157 = vector.load %arg12[%c16_51, %c0_52] : memref<64x128xf32, #tpu.memory_space<vmem>>, vector<16x128xf32>
    tpu.vector_store %arg12[%c16_51, %c0_52], %153 {strides = array<i32>} : memref<64x128xf32, #tpu.memory_space<vmem>>, vector<16x128xf32>,
    %158 = vector.extract_strided_slice %130 {offsets = [32, 0], sizes = [16, 128], strides = [1, 1]} : vector<64x128xf32> to vector<16x128xf32>
    %159 = arith.subf %158, %156 : vector<16x128xf32>
    %160 = vector.broadcast %2 : f32 to vector<16x128xf32>
    %161 = arith.mulf %159, %160 : vector<16x128xf32>
    %162 = arith.addf %156, %161 : vector<16x128xf32>
    %163 = vector.broadcast %4 : f32 to vector<16x128xf32>
    %164 = arith.cmpf oge, %162, %163 : vector<16x128xf32>
    %165 = arith.extui %164 : vector<16x128xi1> to vector<16x128xi32>
    %166 = arith.sitofp %165 : vector<16x128xi32> to vector<16x128xf32>
    %cst_53 = arith.constant 1.000000e+00 : f32
    %167 = vector.broadcast %cst_53 : f32 to vector<16x128xf32>
    %168 = arith.subf %167, %166 : vector<16x128xf32>
    %169 = arith.mulf %162, %168 : vector<16x128xf32>
    %c32_54 = arith.constant 32 : index
    %c0_55 = arith.constant 0 : index
    %170 = vector.load %arg12[%c32_54, %c0_55] : memref<64x128xf32, #tpu.memory_space<vmem>>, vector<16x128xf32>
    tpu.vector_store %arg12[%c32_54, %c0_55], %166 {strides = array<i32>} : memref<64x128xf32, #tpu.memory_space<vmem>>, vector<16x128xf32>,
    %171 = vector.extract_strided_slice %130 {offsets = [48, 0], sizes = [16, 128], strides = [1, 1]} : vector<64x128xf32> to vector<16x128xf32>
    %172 = arith.subf %171, %169 : vector<16x128xf32>
    %173 = vector.broadcast %2 : f32 to vector<16x128xf32>
    %174 = arith.mulf %172, %173 : vector<16x128xf32>
    %175 = arith.addf %169, %174 : vector<16x128xf32>
    %176 = vector.broadcast %4 : f32 to vector<16x128xf32>
    %177 = arith.cmpf oge, %175, %176 : vector<16x128xf32>
    %178 = arith.extui %177 : vector<16x128xi1> to vector<16x128xi32>
    %179 = arith.sitofp %178 : vector<16x128xi32> to vector<16x128xf32>
    %c48_56 = arith.constant 48 : index
    %c0_57 = arith.constant 0 : index
    %180 = vector.load %arg12[%c48_56, %c0_57] : memref<64x128xf32, #tpu.memory_space<vmem>>, vector<16x128xf32>
    tpu.vector_store %arg12[%c48_56, %c0_57], %179 {strides = array<i32>} : memref<64x128xf32, #tpu.memory_space<vmem>>, vector<16x128xf32>,
    %c0_58 = arith.constant 0 : index
    %c0_59 = arith.constant 0 : index
    %181 = vector.load %arg12[%c0_58, %c0_59] : memref<64x128xf32, #tpu.memory_space<vmem>>, vector<64x128xf32>
    %182 = arith.truncf %181 : vector<64x128xf32> to vector<64x128xbf16>
    %c0_60 = arith.constant 0 : index
    %c0_61 = arith.constant 0 : index
    %183 = vector.load %arg7[%c0_60, %c0_61] : memref<128x128xf32, #tpu.memory_space<vmem>>, vector<128x128xf32>
    %184 = arith.truncf %183 : vector<128x128xf32> to vector<128x128xbf16>
    %cst_62 = arith.constant dense<0.000000e+00> : vector<64x128xf32>
    %185 = tpu.matmul %182, %184, %cst_62 {dimension_numbers = #tpu.dot_dimension_numbers<[1], [0], [0], [1], [0, 0, 1, 1], [], []>} : vector<64x128xbf16>, vector<128x128xbf16>, vector<64x128xf32> -> vector<64x128xf32>
    %c0_63 = arith.constant 0 : index
    %c0_64 = arith.constant 0 : index
    %186 = vector.load %arg8[%c0_63, %c0_64] : memref<1x128xf32, #tpu.memory_space<vmem>>, vector<1x128xf32>
    %187 = vector.broadcast %186 : vector<1x128xf32> to vector<64x128xf32>
    %188 = arith.addf %185, %187 : vector<64x128xf32>
    %cst_65 = arith.constant 0.000000e+00 : f32
    %189 = vector.broadcast %cst_65 : f32 to vector<16x128xf32>
    %cst_66 = arith.constant 0.000000e+00 : f32
    %190 = vector.broadcast %cst_66 : f32 to vector<16x128xf32>
    %191 = vector.extract_strided_slice %188 {offsets = [0, 0], sizes = [16, 128], strides = [1, 1]} : vector<64x128xf32> to vector<16x128xf32>
    %192 = arith.subf %191, %189 : vector<16x128xf32>
    %193 = vector.broadcast %3 : f32 to vector<16x128xf32>
    %194 = arith.mulf %192, %193 : vector<16x128xf32>
    %195 = arith.addf %189, %194 : vector<16x128xf32>
    %196 = vector.broadcast %4 : f32 to vector<16x128xf32>
    %197 = arith.cmpf oge, %195, %196 : vector<16x128xf32>
    %198 = arith.extui %197 : vector<16x128xi1> to vector<16x128xi32>
    %199 = arith.sitofp %198 : vector<16x128xi32> to vector<16x128xf32>
    %cst_67 = arith.constant 1.000000e+00 : f32
    %200 = vector.broadcast %cst_67 : f32 to vector<16x128xf32>
    %201 = arith.subf %200, %199 : vector<16x128xf32>
    %202 = arith.mulf %195, %201 : vector<16x128xf32>
    %203 = arith.addf %190, %199 : vector<16x128xf32>
    %204 = vector.extract_strided_slice %188 {offsets = [16, 0], sizes = [16, 128], strides = [1, 1]} : vector<64x128xf32> to vector<16x128xf32>
    %205 = arith.subf %204, %202 : vector<16x128xf32>
    %206 = vector.broadcast %3 : f32 to vector<16x128xf32>
    %207 = arith.mulf %205, %206 : vector<16x128xf32>
    %208 = arith.addf %202, %207 : vector<16x128xf32>
    %209 = vector.broadcast %4 : f32 to vector<16x128xf32>
    %210 = arith.cmpf oge, %208, %209 : vector<16x128xf32>
    %211 = arith.extui %210 : vector<16x128xi1> to vector<16x128xi32>
    %212 = arith.sitofp %211 : vector<16x128xi32> to vector<16x128xf32>
    %cst_68 = arith.constant 1.000000e+00 : f32
    %213 = vector.broadcast %cst_68 : f32 to vector<16x128xf32>
    %214 = arith.subf %213, %212 : vector<16x128xf32>
    %215 = arith.mulf %208, %214 : vector<16x128xf32>
    %216 = arith.addf %203, %212 : vector<16x128xf32>
    %217 = vector.extract_strided_slice %188 {offsets = [32, 0], sizes = [16, 128], strides = [1, 1]} : vector<64x128xf32> to vector<16x128xf32>
    %218 = arith.subf %217, %215 : vector<16x128xf32>
    %219 = vector.broadcast %3 : f32 to vector<16x128xf32>
    %220 = arith.mulf %218, %219 : vector<16x128xf32>
    %221 = arith.addf %215, %220 : vector<16x128xf32>
    %222 = vector.broadcast %4 : f32 to vector<16x128xf32>
    %223 = arith.cmpf oge, %221, %222 : vector<16x128xf32>
    %224 = arith.extui %223 : vector<16x128xi1> to vector<16x128xi32>
    %225 = arith.sitofp %224 : vector<16x128xi32> to vector<16x128xf32>
    %cst_69 = arith.constant 1.000000e+00 : f32
    %226 = vector.broadcast %cst_69 : f32 to vector<16x128xf32>
    %227 = arith.subf %226, %225 : vector<16x128xf32>
    %228 = arith.mulf %221, %227 : vector<16x128xf32>
    %229 = arith.addf %216, %225 : vector<16x128xf32>
    %230 = vector.extract_strided_slice %188 {offsets = [48, 0], sizes = [16, 128], strides = [1, 1]} : vector<64x128xf32> to vector<16x128xf32>
    %231 = arith.subf %230, %228 : vector<16x128xf32>
    %232 = vector.broadcast %3 : f32 to vector<16x128xf32>
    %233 = arith.mulf %231, %232 : vector<16x128xf32>
    %234 = arith.addf %228, %233 : vector<16x128xf32>
    %235 = vector.broadcast %4 : f32 to vector<16x128xf32>
    %236 = arith.cmpf oge, %234, %235 : vector<16x128xf32>
    %237 = arith.extui %236 : vector<16x128xi1> to vector<16x128xi32>
    %238 = arith.sitofp %237 : vector<16x128xi32> to vector<16x128xf32>
    %239 = arith.addf %229, %238 : vector<16x128xf32>
    %cst_70 = arith.constant 2.500000e-01 : f32
    %240 = vector.broadcast %cst_70 : f32 to vector<16x128xf32>
    %241 = arith.mulf %239, %240 : vector<16x128xf32>
    %242 = arith.truncf %241 : vector<16x128xf32> to vector<16x128xbf16>
    %c0_71 = arith.constant 0 : index
    %c0_72 = arith.constant 0 : index
    %243 = vector.load %arg9[%c0_71, %c0_72] : memref<128x128xf32, #tpu.memory_space<vmem>>, vector<128x128xf32>
    %244 = arith.truncf %243 : vector<128x128xf32> to vector<128x128xbf16>
    %cst_73 = arith.constant dense<0.000000e+00> : vector<16x128xf32>
    %245 = tpu.matmul %242, %244, %cst_73 {dimension_numbers = #tpu.dot_dimension_numbers<[1], [0], [0], [1], [0, 0, 1, 1], [], []>} : vector<16x128xbf16>, vector<128x128xbf16>, vector<16x128xf32> -> vector<16x128xf32>
    %c0_74 = arith.constant 0 : index
    %c0_75 = arith.constant 0 : index
    %246 = vector.load %arg10[%c0_74, %c0_75] : memref<1x128xf32, #tpu.memory_space<vmem>>, vector<1x128xf32>
    %247 = vector.broadcast %246 : vector<1x128xf32> to vector<16x128xf32>
    %248 = arith.addf %245, %247 : vector<16x128xf32>
    %249 = tpu.iota {dimensions = array<i32: 1>} : vector<16x128xi32>
    %c4_i32 = arith.constant 4 : i32
    %250 = vector.broadcast %c4_i32 : i32 to vector<16x128xi32>
    %251 = arith.cmpi slt, %249, %250 : vector<16x128xi32>
    %252 = arith.negf %248 : vector<16x128xf32>
    %253 = math.exp %252 : vector<16x128xf32>
    %cst_76 = arith.constant 1.000000e+00 : f32
    %254 = vector.broadcast %cst_76 : f32 to vector<16x128xf32>
    %255 = arith.addf %254, %253 : vector<16x128xf32>
    %256 = arith.divf %254, %255 : vector<16x128xf32>
    %257 = arith.select %251, %122, %256 : vector<16x128xi1>, vector<16x128xf32>
    %c0_77 = arith.constant 0 : index
    %c0_78 = arith.constant 0 : index
    %c0_79 = arith.constant 0 : index
    %258 = vector.load %arg11[%c0_77, %c0_78, %c0_79] : memref<1x16x128xf32, #tpu.memory_space<vmem>>, vector<1x16x128xf32>
    %259 = vector.shape_cast %258 : vector<1x16x128xf32> to vector<16x128xf32>
    %260 = vector.shape_cast %257 : vector<16x128xf32> to vector<1x16x128xf32>
    tpu.vector_store %arg11[%c0_77, %c0_78, %c0_79], %260 {strides = array<i32>} : memref<1x16x128xf32, #tpu.memory_space<vmem>>, vector<1x16x128xf32>,
    return
  }
  func.func @transform_0(%arg0: i32) -> i32 {
    %c0_i32 = arith.constant 0 : i32
    %c0_i32_0 = arith.constant 0 : i32
    return %c0_i32 : i32
  }
  func.func @transform_1(%arg0: i32) -> (i32, i32, i32, i32, i32) {
    %c0_i32 = arith.constant 0 : i32
    %c0_i32_0 = arith.constant 0 : i32
    %c0_i32_1 = arith.constant 0 : i32
    %c0_i32_2 = arith.constant 0 : i32
    %c0_i32_3 = arith.constant 0 : i32
    return %arg0, %c0_i32, %c0_i32_0, %c0_i32_1, %c0_i32_2 : i32, i32, i32, i32, i32
  }
  func.func @transform_2(%arg0: i32) -> (i32, i32) {
    %c0_i32 = arith.constant 0 : i32
    %c0_i32_0 = arith.constant 0 : i32
    %c0_i32_1 = arith.constant 0 : i32
    return %c0_i32, %c0_i32_0 : i32, i32
  }
  func.func @transform_3(%arg0: i32) -> (i32, i32) {
    %c0_i32 = arith.constant 0 : i32
    %c0_i32_0 = arith.constant 0 : i32
    %c0_i32_1 = arith.constant 0 : i32
    return %c0_i32, %c0_i32_0 : i32, i32
  }
  func.func @transform_4(%arg0: i32) -> (i32, i32) {
    %c0_i32 = arith.constant 0 : i32
    %c0_i32_0 = arith.constant 0 : i32
    %c0_i32_1 = arith.constant 0 : i32
    return %c0_i32, %c0_i32_0 : i32, i32
  }
  func.func @transform_5(%arg0: i32) -> (i32, i32) {
    %c0_i32 = arith.constant 0 : i32
    %c0_i32_0 = arith.constant 0 : i32
    %c0_i32_1 = arith.constant 0 : i32
    return %c0_i32, %c0_i32_0 : i32, i32
  }
  func.func @transform_6(%arg0: i32) -> (i32, i32) {
    %c0_i32 = arith.constant 0 : i32
    %c0_i32_0 = arith.constant 0 : i32
    %c0_i32_1 = arith.constant 0 : i32
    return %c0_i32, %c0_i32_0 : i32, i32
  }
  func.func @transform_7(%arg0: i32) -> (i32, i32) {
    %c0_i32 = arith.constant 0 : i32
    %c0_i32_0 = arith.constant 0 : i32
    %c0_i32_1 = arith.constant 0 : i32
    return %c0_i32, %c0_i32_0 : i32, i32
  }
  func.func @transform_8(%arg0: i32) -> (i32, i32) {
    %c0_i32 = arith.constant 0 : i32
    %c0_i32_0 = arith.constant 0 : i32
    %c0_i32_1 = arith.constant 0 : i32
    return %c0_i32, %c0_i32_0 : i32, i32
  }
  func.func @transform_9(%arg0: i32) -> (i32, i32) {
    %c0_i32 = arith.constant 0 : i32
    %c0_i32_0 = arith.constant 0 : i32
    %c0_i32_1 = arith.constant 0 : i32
    return %c0_i32, %c0_i32_0 : i32, i32
  }
  func.func @transform_10(%arg0: i32) -> (i32, i32, i32) {
    %c0_i32 = arith.constant 0 : i32
    %c0_i32_0 = arith.constant 0 : i32
    %c0_i32_1 = arith.constant 0 : i32
    return %arg0, %c0_i32, %c0_i32_0 : i32, i32, i32
  }
}

</mosaic_0001>

<llo_original>
// kernel: spiking_detr_forward.2
$region0: #{spiking_detr_forward.2}
  #allocation0 [shape = 'u32[]', space=smem, size = 0x4, offset = 0x4, fixed_abs, tag = 'smem constant byte address 0x4 - core index']
  #allocation1 [shape = 'u32[144,128]{1,0:T(1,128)}', space=vmem, size = 0x12000, scoped, tag = 'internal scratch']
  %s0 = inlined_call_operand.vmem [shape: bf16[512,8], index: 0, kind: input, shape index: {}]
  %s1 = inlined_call_operand.vmem [shape: f32[8,128], index: 1, kind: input, shape index: {}]
  %s2 = inlined_call_operand.vmem [shape: f32[1,128], index: 2, kind: input, shape index: {}]
  %s3 = inlined_call_operand.vmem [shape: f32[512,128], index: 3, kind: output, shape index: {}]
  %s4 = sld [smem:[#allocation0]]
  $region45: #{spiking_detr_forward.2} parent=0
    _
  %s6 = ssub.s32 1, %s4
  %s7 = scalar_select 0, %s6, %s4
  loop: start=0, step=1, limit=4
  $region2: #{spiking_detr_forward.2} parent=0 // loop_pre_header
    _
  $region3: #{spiking_detr_forward.2} parent=0 // loop_header
    %s9 = sphi 0, %s13
    %p10 = scmp.ge.s32.totalorder %s9, 4
    %s19 = sphi 0, %s21
    %s22 = sphi 0, %s19
    %s23 = sphi 0, %s22
    %s39 = sphi 0, %s23
    %s43 = sphi 0, %s43
    %s45 = sphi 0, %s43
    %s46 = sphi 0, %s45
    %s60 = sphi 0, %s46
    %s64 = sphi 0, %s64
    %s66 = sphi 0, %s64
    %s67 = sphi 0, %s66
    %s81 = sphi 0, %s67
    %s87 = sphi 0, %s89
    %s90 = sphi 0, %s87
    %s91 = sphi 0, %s90
    %s107 = sphi 0, %s91
  $region4: #{spiking_detr_forward.2} parent=0 // loop_header_branch
    %12 = sbr.rel (%p10) target = $region8
  $region5: #{spiking_detr_forward.2} parent=0 // loop_body
    %s14 = ssub.s32 %s9, 1
    %s15 = ssub.s32 %s9, 2
    %s16 = sadd.s32 %s9, 1
    %s17 = ssub.s32 %s9, %s16
    %p18 = scmp.eq.s32.totalorder %s17, 0
    %s20 = sadd.s32 %s19, 1
    %s21 = scalar_select %p18, %s19, %s20
    %p24 = pneg %p18
    %p25 = scmp.eq.s32.totalorder %s9, 1
    %p26 = por %p24, %p25
    %p27 = scmp.ne.s32.totalorder %s19, %s22
    %p28 = scmp.eq.s32.totalorder %s9, 0
    %p29 = por %p27, %p28
    %p30 = scmp.ne.s32.totalorder %s19, %s22
    %p31 = scmp.eq.s32.totalorder %s14, 1
    %p32 = por %p30, %p31
    %p33 = scmp.ne.s32.totalorder %s22, %s23
    %p34 = scmp.eq.s32.totalorder %s14, 0
    %p35 = por %p33, %p34
    %p36 = scmp.ne.s32.totalorder %s22, %s23
    %p37 = scmp.eq.s32.totalorder %s15, 1
    %p38 = por %p36, %p37
    %p40 = scmp.ne.s32.totalorder %s23, %s39
    %p41 = scmp.eq.s32.totalorder %s15, 0
    %p42 = por %p40, %p41
    %s44 = sadd.s32 %s43, 1
    %p47 = scmp.eq.s32.totalorder %s9, 1
    %p48 = scmp.ne.s32.totalorder %s43, %s45
    %p49 = scmp.eq.s32.totalorder %s9, 0
    %p50 = por %p48, %p49
    %p51 = scmp.ne.s32.totalorder %s43, %s45
    %p52 = scmp.eq.s32.totalorder %s14, 1
    %p53 = por %p51, %p52
    %p54 = scmp.ne.s32.totalorder %s45, %s46
    %p55 = scmp.eq.s32.totalorder %s14, 0
    %p56 = por %p54, %p55
    %p57 = scmp.ne.s32.totalorder %s45, %s46
    %p58 = scmp.eq.s32.totalorder %s15, 1
    %p59 = por %p57, %p58
    %p61 = scmp.ne.s32.totalorder %s46, %s60
    %p62 = scmp.eq.s32.totalorder %s15, 0
    %p63 = por %p61, %p62
    %s65 = sadd.s32 %s64, 1
    %p68 = scmp.eq.s32.totalorder %s9, 1
    %p69 = scmp.ne.s32.totalorder %s64, %s66
    %p70 = scmp.eq.s32.totalorder %s9, 0
    %p71 = por %p69, %p70
    %p72 = scmp.ne.s32.totalorder %s64, %s66
    %p73 = scmp.eq.s32.totalorder %s14, 1
    %p74 = por %p72, %p73
    %p75 = scmp.ne.s32.totalorder %s66, %s67
    %p76 = scmp.eq.s32.totalorder %s14, 0
    %p77 = por %p75, %p76
    %p78 = scmp.ne.s32.totalorder %s66, %s67
    %p79 = scmp.eq.s32.totalorder %s15, 1
    %p80 = por %p78, %p79
    %p82 = scmp.ne.s32.totalorder %s67, %s81
    %p83 = scmp.eq.s32.totalorder %s15, 0
    %p84 = por %p82, %p83
    %s85 = ssub.s32 %s9, %s16
    %p86 = scmp.eq.s32.totalorder %s85, 0
    %s88 = sadd.s32 %s87, 1
    %s89 = scalar_select %p86, %s87, %s88
    %p92 = pneg %p86
    %p93 = scmp.eq.s32.totalorder %s9, 1
    %p94 = por %p92, %p93
    %p95 = scmp.ne.s32.totalorder %s87, %s90
    %p96 = scmp.eq.s32.totalorder %s9, 0
    %p97 = por %p95, %p96
    %p98 = scmp.ne.s32.totalorder %s87, %s90
    %p99 = scmp.eq.s32.totalorder %s14, 1
    %p100 = por %p98, %p99
    %p101 = scmp.ne.s32.totalorder %s90, %s91
    %p102 = scmp.eq.s32.totalorder %s14, 0
    %p103 = por %p101, %p102
    %p104 = scmp.ne.s32.totalorder %s90, %s91
    %p105 = scmp.eq.s32.totalorder %s15, 1
    %p106 = por %p104, %p105
    %p108 = scmp.ne.s32.totalorder %s91, %s107
    %p109 = scmp.eq.s32.totalorder %s15, 0
    %p110 = por %p108, %p109
    %p111 = scmp.le.s32.totalorder 1, %s9
    %p112 = scmp.lt.s32.totalorder %s9, 3
    %p113 = pnand %p111, %p112
    %p114 = pneg %p113
    // Predicated region
    $region9: #{spiking_detr_forward.2} parent=5 // pred_check
      _
    $region10: #{spiking_detr_forward.2} parent=5 // pred_check_branch
      %116 = sbr.rel (%p113) target = $region12
    $region11: #{spiking_detr_forward.2} parent=5 // pred_region
      %s117 = ssub.s32 %s9, 1
      // Predicated region
      $region13: #{spiking_detr_forward.2} parent=11 // pred_check
        %p118 = pneg %p56
      $region14: #{spiking_detr_forward.2} parent=11 // pred_check_branch
        %120 = sbr.rel (%p118) target = $region16
      $region15: #{spiking_detr_forward.2} parent=11 // pred_region
        _
      $region16: #{spiking_detr_forward.2} parent=11 // pred_fallthru
        _
      // Predicated region
      $region17: #{spiking_detr_forward.2} parent=11 // pred_check
        %p121 = pneg %p77
      $region18: #{spiking_detr_forward.2} parent=11 // pred_check_branch
        %123 = sbr.rel (%p121) target = $region20
      $region19: #{spiking_detr_forward.2} parent=11 // pred_region
        _
      $region20: #{spiking_detr_forward.2} parent=11 // pred_fallthru
        _
    $region12: #{spiking_detr_forward.2} parent=5 // pred_fallthru
      _
    %p124 = scmp.lt.s32.totalorder %s9, 2
    // Predicated region
    $region21: #{spiking_detr_forward.2} parent=5 // pred_check
      %p125 = pneg %p124
    $region22: #{spiking_detr_forward.2} parent=5 // pred_check_branch
      %127 = sbr.rel (%p125) target = $region24
    $region23: #{spiking_detr_forward.2} parent=5 // pred_region
      // Predicated region
      $region25: #{spiking_detr_forward.2} parent=23 // pred_check
        %p128 = pneg %p29
      $region26: #{spiking_detr_forward.2} parent=23 // pred_check_branch
        %130 = sbr.rel (%p128) target = $region28
      $region27: #{spiking_detr_forward.2} parent=23 // pred_region
        %s131 = smul.u32 32, %s9
        %p132 = scmp.lt.s32.totalorder %s131, 63
        %s133 = scalar_select %p132, %s131, 63
        %s134 = smul.addr %s133, 4
        %s135 = scalar_lea.vmem %s0, %s134
        %s136 = smul.u32 32, %s9
      $region28: #{spiking_detr_forward.2} parent=23 // pred_fallthru
        _
    $region24: #{spiking_detr_forward.2} parent=5 // pred_fallthru
      _
    %p137 = scmp.le.s32.totalorder 1, %s9
    %p138 = scmp.lt.s32.totalorder %s9, 3
    %p139 = pnand %p137, %p138
    %p140 = pneg %p139
    // Predicated region
    $region29: #{spiking_detr_forward.2} parent=5 // pred_check
      _
    $region30: #{spiking_detr_forward.2} parent=5 // pred_check_branch
      %142 = sbr.rel (%p139) target = $region32
    $region31: #{spiking_detr_forward.2} parent=5 // pred_region
      %s143 = ssub.s32 %s9, 1
      %s144 = smul.u32 32, %s14
      %p145 = scmp.lt.s32.totalorder %s144, 63
      %s146 = scalar_select %p145, %s144, 63
      %s147 = smul.addr %s146, 4
      %s148 = scalar_lea.vmem %s0, %s147
      %p149 = pneg %p35
      %p150 = pneg %p32
      %p151 = pneg %p56
      %p152 = pneg %p53
      %p153 = pneg %p77
      %p154 = pneg %p74
      %p155 = pneg %p103
      %p156 = pneg %p100
      %s157 = smul.u32 32, %s14
      %p158 = scmp.lt.s32.totalorder %s157, 63
      %s159 = scalar_select %p158, %s157, 63
      %s160 = smul.addr %s159, 8
      %s161 = scalar_lea.vmem %s3, %s160
      %s162 = smul.u32 32, %s14
      %p163 = scmp.lt.s32.totalorder %s162, 63
      %s164 = scalar_select %p163, %s162, 63
      %s165 = smul.addr %s164, 4
      %s166 = scalar_lea.vmem %s0, %s165
      %s167 = smul.u32 32, %s14
      %s168 = smul.u32 32, %s14
      %p169 = scmp.lt.s32.totalorder %s168, 63
      %s170 = scalar_select %p169, %s168, 63
      %s171 = smul.addr %s170, 8
      %s172 = scalar_lea.vmem %s3, %s171
      %s173 = smul.u32 32, %s14
      %v175 = vld [vmem:[%s166] sm:$0xf]
      %v176 = vld [vmem:[%s166 + $0x4] sm:$0xf]
      %v177 = vld [vmem:[%s166 + $0x8] sm:$0xf]
      %v178 = vld [vmem:[%s166 + $0xc] sm:$0xf]
      %v179 = vld [vmem:[%s166 + $0x10] sm:$0xf]
      %v180 = vld [vmem:[%s166 + $0x14] sm:$0xf]
      %v181 = vld [vmem:[%s166 + $0x18] sm:$0xf]
      %v182 = vld [vmem:[%s166 + $0x1c] sm:$0xf]
      %v183 = vld [vmem:[%s166 + $0x20] sm:$0xf]
      %v184 = vld [vmem:[%s166 + $0x24] sm:$0xf]
      %v185 = vld [vmem:[%s166 + $0x28] sm:$0xf]
      %v186 = vld [vmem:[%s166 + $0x2c] sm:$0xf]
      %v187 = vld [vmem:[%s166 + $0x30] sm:$0xf]
      %v188 = vld [vmem:[%s166 + $0x34] sm:$0xf]
      %v189 = vld [vmem:[%s166 + $0x38] sm:$0xf]
      %v190 = vld [vmem:[%s166 + $0x3c] sm:$0xf]
      %v191 = vld [vmem:[%s166 + $0x40] sm:$0xf]
      %v192 = vld [vmem:[%s166 + $0x44] sm:$0xf]
      %v193 = vld [vmem:[%s166 + $0x48] sm:$0xf]
      %v194 = vld [vmem:[%s166 + $0x4c] sm:$0xf]
      %v195 = vld [vmem:[%s166 + $0x50] sm:$0xf]
      %v196 = vld [vmem:[%s166 + $0x54] sm:$0xf]
      %v197 = vld [vmem:[%s166 + $0x58] sm:$0xf]
      %v198 = vld [vmem:[%s166 + $0x5c] sm:$0xf]
      %v199 = vld [vmem:[%s166 + $0x60] sm:$0xf]
      %v200 = vld [vmem:[%s166 + $0x64] sm:$0xf]
      %v201 = vld [vmem:[%s166 + $0x68] sm:$0xf]
      %v202 = vld [vmem:[%s166 + $0x6c] sm:$0xf]
      %v203 = vld [vmem:[%s166 + $0x70] sm:$0xf]
      %v204 = vld [vmem:[%s166 + $0x74] sm:$0xf]
      %v205 = vld [vmem:[%s166 + $0x78] sm:$0xf]
      %v206 = vld [vmem:[%s166 + $0x7c] sm:$0xf]
      %v207 = vld [vmem:[%s1] sm:$0xff]
      %v208 = vpack.c.bf16 %v207, %v207
      %v209 = vld [vmem:[%s2] sm:$0x1]
      %v211 = vlaneseq
      %v212 = vshrl.u32 %v211, 7
      %v213 = vsub.s32 0, %v212
      %v214 = vrot.slane %v209, %v213
      %v248 = vunpack.c.l.b16 %v175
      %v249 = vunpack.c.l.b16 %v176
      %v250 = vunpack.c.l.b16 %v177
      %v251 = vunpack.c.l.b16 %v178
      %v252 = vunpack.c.l.b16 %v179
      %v253 = vunpack.c.l.b16 %v180
      %v254 = vunpack.c.l.b16 %v181
      %v255 = vunpack.c.l.b16 %v182
      %v256 = vunpack.c.l.b16 %v183
      %v257 = vunpack.c.l.b16 %v184
      %v258 = vunpack.c.l.b16 %v185
      %v259 = vunpack.c.l.b16 %v186
      %v260 = vunpack.c.l.b16 %v187
      %v261 = vunpack.c.l.b16 %v188
      %v262 = vunpack.c.l.b16 %v189
      %v263 = vunpack.c.l.b16 %v190
      %v264 = vunpack.c.l.b16 %v191
      %v265 = vunpack.c.l.b16 %v192
      %v266 = vunpack.c.l.b16 %v193
      %v267 = vunpack.c.l.b16 %v194
      %v268 = vunpack.c.l.b16 %v195
      %v269 = vunpack.c.l.b16 %v196
      %v270 = vunpack.c.l.b16 %v197
      %v271 = vunpack.c.l.b16 %v198
      %v272 = vunpack.c.l.b16 %v199
      %v273 = vunpack.c.l.b16 %v200
      %v274 = vunpack.c.l.b16 %v201
      %v275 = vunpack.c.l.b16 %v202
      %v276 = vunpack.c.l.b16 %v203
      %v277 = vunpack.c.l.b16 %v204
      %v278 = vunpack.c.l.b16 %v205
      %v279 = vunpack.c.l.b16 %v206
      %v280 = vpack.c.b16 %v249, %v248
      %v281 = vpack.c.b16 %v251, %v250
      %v282 = vpack.c.b16 %v253, %v252
      %v283 = vpack.c.b16 %v255, %v254
      %v284 = vpack.c.b16 %v257, %v256
      %v285 = vpack.c.b16 %v259, %v258
      %v286 = vpack.c.b16 %v261, %v260
      %v287 = vpack.c.b16 %v263, %v262
      %v288 = vpack.c.b16 %v265, %v264
      %v289 = vpack.c.b16 %v267, %v266
      %v290 = vpack.c.b16 %v269, %v268
      %v291 = vpack.c.b16 %v271, %v270
      %v292 = vpack.c.b16 %v273, %v272
      %v293 = vpack.c.b16 %v275, %v274
      %v294 = vpack.c.b16 %v277, %v276
      %v295 = vpack.c.b16 %v279, %v278
      %vm296 = vcmask 64512
      %v298 = vsel %vm296, %v280, 0
      %v301 = vsel %vm296, %v281, 0
      %v304 = vsel %vm296, %v282, 0
      %v307 = vsel %vm296, %v283, 0
      %v310 = vsel %vm296, %v284, 0
      %v313 = vsel %vm296, %v285, 0
      %v316 = vsel %vm296, %v286, 0
      %v319 = vsel %vm296, %v287, 0
      %v322 = vsel %vm296, %v288, 0
      %v325 = vsel %vm296, %v289, 0
      %v328 = vsel %vm296, %v290, 0
      %v331 = vsel %vm296, %v291, 0
      %v334 = vsel %vm296, %v292, 0
      %v337 = vsel %vm296, %v293, 0
      %v340 = vsel %vm296, %v294, 0
      %v343 = vsel %vm296, %v295, 0
      %vm345 = vcmask 1043456
      %v347 = vsel %vm345, %v208, 0
      %349 = vmatprep.subr.bf16.mxu0 0
      %350 = vmatpush1.bf16.msra.mxu0 0
      %351 = vmatprep.subr.bf16.mxu0 0
      %352 = vmatpush1.bf16.msra.mxu0 0
      %353 = vmatprep.subr.bf16.mxu0 0
      %354 = vmatpush1.bf16.msra.mxu0 0
      %355 = vmatprep.subr.bf16.mxu0 0
      %356 = vmatpush1.bf16.msra.mxu0 0
      %357 = vmatprep.subr.bf16.mxu0 0
      %358 = vmatpush1.bf16.msra.mxu0 0
      %359 = vmatprep.subr.bf16.mxu0 0
      %360 = vmatpush1.bf16.msra.mxu0 0
      %361 = vmatprep.subr.bf16.mxu0 0
      %362 = vmatpush1.bf16.msra.mxu0 0
      %363 = vmatprep.subr.bf16.mxu0 0
      %364 = vmatpush1.bf16.msra.mxu0 %v347
      %365 = vmatprep.subr.bf16.mxu0 0
      %366 = vmatpush2.bf16.msra.mxu0 0
      %367 = vmatprep.subr.bf16.mxu0 0
      %368 = vmatpush2.bf16.msra.mxu0 0
      %369 = vmatprep.subr.bf16.mxu0 0
      %370 = vmatpush2.bf16.msra.mxu0 0
      %371 = vmatprep.subr.bf16.mxu0 0
      %372 = vmatpush2.bf16.msra.mxu0 0
      %373 = vmatprep.subr.bf16.mxu0 0
      %374 = vmatpush2.bf16.msra.mxu0 0
      %375 = vmatprep.subr.bf16.mxu0 0
      %376 = vmatpush2.bf16.msra.mxu0 0
      %377 = vmatprep.subr.bf16.mxu0 0
      %378 = vmatpush2.bf16.msra.mxu0 0
      %379 = vmatprep.subr.bf16.mxu0 0
      %380 = vmatpush2.bf16.msra.mxu0 0
      %381 = vmatprep.mubr.bf16.mxu0 0
      %382 = vmatmul.mubr.bf16.gmra.mxu0 %v298
      %v383 = vpop.f32.mrf.mxu0
      %v384 = vadd.f32 %v214, %v383
      %v385 = vpop.f32.mrf.mxu0
      %v386 = vpop.f32.mrf.mxu0
      %v387 = vadd.f32 %v214, %v386
      %v388 = vpop.f32.mrf.mxu0
      %389 = vmatprep.mubr.bf16.mxu0 0
      %390 = vmatmul.mubr.bf16.gmra.mxu0 %v301
      %v391 = vpop.f32.mrf.mxu0
      %v392 = vadd.f32 %v214, %v391
      %v393 = vpop.f32.mrf.mxu0
      %v394 = vpop.f32.mrf.mxu0
      %v395 = vadd.f32 %v214, %v394
      %v396 = vpop.f32.mrf.mxu0
      %397 = vmatprep.mubr.bf16.mxu0 0
      %398 = vmatmul.mubr.bf16.gmra.mxu0 %v304
      %v399 = vpop.f32.mrf.mxu0
      %v400 = vadd.f32 %v214, %v399
      %v401 = vpop.f32.mrf.mxu0
      %v402 = vpop.f32.mrf.mxu0
      %v403 = vadd.f32 %v214, %v402
      %v404 = vpop.f32.mrf.mxu0
      %405 = vmatprep.mubr.bf16.mxu0 0
      %406 = vmatmul.mubr.bf16.gmra.mxu0 %v307
      %v407 = vpop.f32.mrf.mxu0
      %v408 = vadd.f32 %v214, %v407
      %v409 = vpop.f32.mrf.mxu0
      %v410 = vpop.f32.mrf.mxu0
      %v411 = vadd.f32 %v214, %v410
      %v412 = vpop.f32.mrf.mxu0
      %413 = vmatprep.mubr.bf16.mxu0 0
      %414 = vmatmul.mubr.bf16.gmra.mxu0 %v310
      %v415 = vpop.f32.mrf.mxu0
      %v416 = vadd.f32 %v214, %v415
      %v417 = vpop.f32.mrf.mxu0
      %v418 = vpop.f32.mrf.mxu0
      %v419 = vadd.f32 %v214, %v418
      %v420 = vpop.f32.mrf.mxu0
      %421 = vmatprep.mubr.bf16.mxu0 0
      %422 = vmatmul.mubr.bf16.gmra.mxu0 %v313
      %v423 = vpop.f32.mrf.mxu0
      %v424 = vadd.f32 %v214, %v423
      %v425 = vpop.f32.mrf.mxu0
      %v426 = vpop.f32.mrf.mxu0
      %v427 = vadd.f32 %v214, %v426
      %v428 = vpop.f32.mrf.mxu0
      %429 = vmatprep.mubr.bf16.mxu0 0
      %430 = vmatmul.mubr.bf16.gmra.mxu0 %v316
      %v431 = vpop.f32.mrf.mxu0
      %v432 = vadd.f32 %v214, %v431
      %v433 = vpop.f32.mrf.mxu0
      %v434 = vpop.f32.mrf.mxu0
      %v435 = vadd.f32 %v214, %v434
      %v436 = vpop.f32.mrf.mxu0
      %437 = vmatprep.mubr.bf16.mxu0 0
      %438 = vmatmul.mubr.bf16.gmra.mxu0 %v319
      %v439 = vpop.f32.mrf.mxu0
      %v440 = vadd.f32 %v214, %v439
      %v441 = vpop.f32.mrf.mxu0
      %v442 = vpop.f32.mrf.mxu0
      %v443 = vadd.f32 %v214, %v442
      %v444 = vpop.f32.mrf.mxu0
      %445 = vmatprep.mubr.bf16.mxu0 0
      %446 = vmatmul.mubr.bf16.gmra.mxu0 %v322
      %v447 = vpop.f32.mrf.mxu0
      %v448 = vadd.f32 %v214, %v447
      %v449 = vpop.f32.mrf.mxu0
      %v450 = vpop.f32.mrf.mxu0
      %v451 = vadd.f32 %v214, %v450
      %v452 = vpop.f32.mrf.mxu0
      %453 = vmatprep.mubr.bf16.mxu0 0
      %454 = vmatmul.mubr.bf16.gmra.mxu0 %v325
      %v455 = vpop.f32.mrf.mxu0
      %v456 = vadd.f32 %v214, %v455
      %v457 = vpop.f32.mrf.mxu0
      %v458 = vpop.f32.mrf.mxu0
      %v459 = vadd.f32 %v214, %v458
      %v460 = vpop.f32.mrf.mxu0
      %461 = vmatprep.mubr.bf16.mxu0 0
      %462 = vmatmul.mubr.bf16.gmra.mxu0 %v328
      %v463 = vpop.f32.mrf.mxu0
      %v464 = vadd.f32 %v214, %v463
      %v465 = vpop.f32.mrf.mxu0
      %v466 = vpop.f32.mrf.mxu0
      %v467 = vadd.f32 %v214, %v466
      %v468 = vpop.f32.mrf.mxu0
      %469 = vmatprep.mubr.bf16.mxu0 0
      %470 = vmatmul.mubr.bf16.gmra.mxu0 %v331
      %v471 = vpop.f32.mrf.mxu0
      %v472 = vadd.f32 %v214, %v471
      %v473 = vpop.f32.mrf.mxu0
      %v474 = vpop.f32.mrf.mxu0
      %v475 = vadd.f32 %v214, %v474
      %v476 = vpop.f32.mrf.mxu0
      %477 = vmatprep.mubr.bf16.mxu0 0
      %478 = vmatmul.mubr.bf16.gmra.mxu0 %v334
      %v479 = vpop.f32.mrf.mxu0
      %v480 = vadd.f32 %v214, %v479
      %v481 = vpop.f32.mrf.mxu0
      %v482 = vpop.f32.mrf.mxu0
      %v483 = vadd.f32 %v214, %v482
      %v484 = vpop.f32.mrf.mxu0
      %485 = vmatprep.mubr.bf16.mxu0 0
      %486 = vmatmul.mubr.bf16.gmra.mxu0 %v337
      %v487 = vpop.f32.mrf.mxu0
      %v488 = vadd.f32 %v214, %v487
      %v489 = vpop.f32.mrf.mxu0
      %v490 = vpop.f32.mrf.mxu0
      %v491 = vadd.f32 %v214, %v490
      %v492 = vpop.f32.mrf.mxu0
      %493 = vmatprep.mubr.bf16.mxu0 0
      %494 = vmatmul.mubr.bf16.gmra.mxu0 %v340
      %v495 = vpop.f32.mrf.mxu0
      %v496 = vadd.f32 %v214, %v495
      %v497 = vpop.f32.mrf.mxu0
      %v498 = vpop.f32.mrf.mxu0
      %v499 = vadd.f32 %v214, %v498
      %v500 = vpop.f32.mrf.mxu0
      %501 = vmatprep.mubr.bf16.mxu0 0
      %502 = vmatmul.mubr.bf16.gmra.mxu0 %v343
      %v503 = vpop.f32.mrf.mxu0
      %v504 = vadd.f32 %v214, %v503
      %v505 = vpop.f32.mrf.mxu0
      %v506 = vpop.f32.mrf.mxu0
      %v507 = vadd.f32 %v214, %v506
      %v508 = vpop.f32.mrf.mxu0
      %509 = vdwg.mxu0
      %510 = vst [vmem:[%s172] sm:$0xff] %v384
      %511 = vst [vmem:[%s172 + $0x8] sm:$0xff] %v387
      %512 = vst [vmem:[%s172 + $0x10] sm:$0xff] %v392
      %513 = vst [vmem:[%s172 + $0x18] sm:$0xff] %v395
      %514 = vst [vmem:[%s172 + $0x20] sm:$0xff] %v400
      %515 = vst [vmem:[%s172 + $0x28] sm:$0xff] %v403
      %516 = vst [vmem:[%s172 + $0x30] sm:$0xff] %v408
      %517 = vst [vmem:[%s172 + $0x38] sm:$0xff] %v411
      %518 = vst [vmem:[%s172 + $0x40] sm:$0xff] %v416
      %519 = vst [vmem:[%s172 + $0x48] sm:$0xff] %v419
      %520 = vst [vmem:[%s172 + $0x50] sm:$0xff] %v424
      %521 = vst [vmem:[%s172 + $0x58] sm:$0xff] %v427
      %522 = vst [vmem:[%s172 + $0x60] sm:$0xff] %v432
      %523 = vst [vmem:[%s172 + $0x68] sm:$0xff] %v435
      %524 = vst [vmem:[%s172 + $0x70] sm:$0xff] %v440
      %525 = vst [vmem:[%s172 + $0x78] sm:$0xff] %v443
      %526 = vst [vmem:[%s172 + $0x80] sm:$0xff] %v448
      %527 = vst [vmem:[%s172 + $0x88] sm:$0xff] %v451
      %528 = vst [vmem:[%s172 + $0x90] sm:$0xff] %v456
      %529 = vst [vmem:[%s172 + $0x98] sm:$0xff] %v459
      %530 = vst [vmem:[%s172 + $0xa0] sm:$0xff] %v464
      %531 = vst [vmem:[%s172 + $0xa8] sm:$0xff] %v467
      %532 = vst [vmem:[%s172 + $0xb0] sm:$0xff] %v472
      %533 = vst [vmem:[%s172 + $0xb8] sm:$0xff] %v475
      %534 = vst [vmem:[%s172 + $0xc0] sm:$0xff] %v480
      %535 = vst [vmem:[%s172 + $0xc8] sm:$0xff] %v483
      %536 = vst [vmem:[%s172 + $0xd0] sm:$0xff] %v488
      %537 = vst [vmem:[%s172 + $0xd8] sm:$0xff] %v491
      %538 = vst [vmem:[%s172 + $0xe0] sm:$0xff] %v496
      %539 = vst [vmem:[%s172 + $0xe8] sm:$0xff] %v499
      %540 = vst [vmem:[%s172 + $0xf0] sm:$0xff] %v504
      %541 = vst [vmem:[%s172 + $0xf8] sm:$0xff] %v507
      %s542 = smul.u32 32, %s14
      %p543 = scmp.lt.s32.totalorder %s542, 63
      %s544 = scalar_select %p543, %s542, 63
      %s545 = smul.addr %s544, 8
      %s546 = scalar_lea.vmem %s3, %s545
      // Predicated region
      $region33: #{spiking_detr_forward.2} parent=31 // pred_check
        %p547 = pneg %p100
      $region34: #{spiking_detr_forward.2} parent=31 // pred_check_branch
        %549 = sbr.rel (%p547) target = $region36
      $region35: #{spiking_detr_forward.2} parent=31 // pred_region
        %s550 = smul.u32 32, %s14
      $region36: #{spiking_detr_forward.2} parent=31 // pred_fallthru
        _
    $region32: #{spiking_detr_forward.2} parent=5 // pred_fallthru
      _
    %p551 = scmp.le.s32.totalorder 2, %s9
    // Predicated region
    $region37: #{spiking_detr_forward.2} parent=5 // pred_check
      %p552 = pneg %p551
    $region38: #{spiking_detr_forward.2} parent=5 // pred_check_branch
      %554 = sbr.rel (%p552) target = $region40
    $region39: #{spiking_detr_forward.2} parent=5 // pred_region
      %s555 = ssub.s32 %s9, 2
      // Predicated region
      $region41: #{spiking_detr_forward.2} parent=39 // pred_check
        %p556 = pneg %p106
      $region42: #{spiking_detr_forward.2} parent=39 // pred_check_branch
        %558 = sbr.rel (%p556) target = $region44
      $region43: #{spiking_detr_forward.2} parent=39 // pred_region
        %s559 = smul.u32 32, %s15
        %p560 = scmp.lt.s32.totalorder %s559, 63
        %s561 = scalar_select %p560, %s559, 63
        %s562 = smul.addr %s561, 8
        %s563 = scalar_lea.vmem %s3, %s562
      $region44: #{spiking_detr_forward.2} parent=39 // pred_fallthru
        _
    $region40: #{spiking_detr_forward.2} parent=5 // pred_fallthru
      _
  $region6: #{spiking_detr_forward.2} parent=0 // loop_footer
    %s13 = sadd.s32 1, %s9
  $region7: #{spiking_detr_forward.2} parent=0 // loop_footer_branch
    %8 = sbr.rel target = $region3
  $region8: #{spiking_detr_forward.2} parent=0 // loop_exit
    _

// kernel: spiking_detr_forward.3
$region0: #{spiking_detr_forward.3}
  #allocation0 [shape = 'u32[]', space=smem, size = 0x4, offset = 0x4, fixed_abs, tag = 'smem constant byte address 0x4 - core index']
  #allocation1 [shape = 'u32[144,128]{1,0:T(1,128)}', space=vmem, size = 0x12000, scoped, tag = 'internal scratch']
  #allocation2 [shape = 'f32[64,128]{1,0:T(8,128)}', space=vmem, size = 0x8000, scoped, tag = 'scratch operand']
  %s0 = inlined_call_operand.vmem [shape: f32[5], index: 0, kind: input, shape index: {}]
  %s1 = inlined_call_operand.vmem [shape: bf16[2,4,2,8,128], index: 1, kind: input, shape index: {}]
  %s2 = inlined_call_operand.vmem [shape: f32[128,128], index: 2, kind: input, shape index: {}]
  %s3 = inlined_call_operand.vmem [shape: f32[1,128], index: 3, kind: input, shape index: {}]
  %s4 = inlined_call_operand.vmem [shape: f32[128,128], index: 4, kind: input, shape index: {}]
  %s5 = inlined_call_operand.vmem [shape: f32[1,128], index: 5, kind: input, shape index: {}]
  %s6 = inlined_call_operand.vmem [shape: f32[128,128], index: 6, kind: input, shape index: {}]
  %s7 = inlined_call_operand.vmem [shape: f32[1,128], index: 7, kind: input, shape index: {}]
  %s8 = inlined_call_operand.vmem [shape: f32[128,128], index: 8, kind: input, shape index: {}]
  %s9 = inlined_call_operand.vmem [shape: f32[1,128], index: 9, kind: input, shape index: {}]
  %s10 = inlined_call_operand.vmem [shape: f32[2,16,128], index: 10, kind: output, shape index: {}]
  %s11 = sld [smem:[#allocation0]]
  $region77: #{spiking_detr_forward.3} parent=0
    _
  %s13 = ssub.s32 1, %s11
  %s14 = scalar_select 0, %s13, %s11
  $region1: #{spiking_detr_forward.3} parent=0
    #allocation3 [shape = 'u8[512]{0}', space=smem, size = 0x200, scoped, tag = 'input window, operand 0, single buffered']
    #allocation4 [shape = 's32[2]{0}', space=sflag, size = 0x8, scoped, tag = 'scoped memory for spiking_detr_forward.3']
    %15 = vsyncpa [#allocation4], 0
    loop: start=0, step=1, limit=4
    $region2: #{spiking_detr_forward.3} parent=1 // loop_pre_header
      _
    $region3: #{spiking_detr_forward.3} parent=1 // loop_header
      %s17 = sphi 0, %s21
      %p18 = scmp.ge.s32.totalorder %s17, 4
      %s25 = sphi 0, %s25
      %s27 = sphi 0, %s25
      %s28 = sphi 0, %s27
      %s42 = sphi 0, %s28
      %s48 = sphi 0, %s50
      %s51 = sphi 0, %s48
      %s52 = sphi 0, %s51
      %s68 = sphi 0, %s52
      %s72 = sphi 0, %s72
      %s74 = sphi 0, %s72
      %s75 = sphi 0, %s74
      %s89 = sphi 0, %s75
      %s93 = sphi 0, %s93
      %s95 = sphi 0, %s93
      %s96 = sphi 0, %s95
      %s110 = sphi 0, %s96
      %s114 = sphi 0, %s114
      %s116 = sphi 0, %s114
      %s117 = sphi 0, %s116
      %s131 = sphi 0, %s117
      %s135 = sphi 0, %s135
      %s137 = sphi 0, %s135
      %s138 = sphi 0, %s137
      %s152 = sphi 0, %s138
      %s156 = sphi 0, %s156
      %s158 = sphi 0, %s156
      %s159 = sphi 0, %s158
      %s173 = sphi 0, %s159
      %s177 = sphi 0, %s177
      %s179 = sphi 0, %s177
      %s180 = sphi 0, %s179
      %s194 = sphi 0, %s180
      %s198 = sphi 0, %s198
      %s200 = sphi 0, %s198
      %s201 = sphi 0, %s200
      %s215 = sphi 0, %s201
      %s219 = sphi 0, %s219
      %s221 = sphi 0, %s219
      %s222 = sphi 0, %s221
      %s236 = sphi 0, %s222
      %s242 = sphi 0, %s244
      %s245 = sphi 0, %s242
      %s246 = sphi 0, %s245
      %s262 = sphi 0, %s246
    $region4: #{spiking_detr_forward.3} parent=1 // loop_header_branch
      %20 = sbr.rel (%p18) target = $region8
    $region5: #{spiking_detr_forward.3} parent=1 // loop_body
      %s22 = ssub.s32 %s17, 1
      %s23 = ssub.s32 %s17, 2
      %s24 = sadd.s32 %s17, 1
      %s26 = sadd.s32 %s25, 1
      %p29 = scmp.eq.s32.totalorder %s17, 1
      %p30 = scmp.ne.s32.totalorder %s25, %s27
      %p31 = scmp.eq.s32.totalorder %s17, 0
      %p32 = por %p30, %p31
      %p33 = scmp.ne.s32.totalorder %s25, %s27
      %p34 = scmp.eq.s32.totalorder %s22, 1
      %p35 = por %p33, %p34
      %p36 = scmp.ne.s32.totalorder %s27, %s28
      %p37 = scmp.eq.s32.totalorder %s22, 0
      %p38 = por %p36, %p37
      %p39 = scmp.ne.s32.totalorder %s27, %s28
      %p40 = scmp.eq.s32.totalorder %s23, 1
      %p41 = por %p39, %p40
      %p43 = scmp.ne.s32.totalorder %s28, %s42
      %p44 = scmp.eq.s32.totalorder %s23, 0
      %p45 = por %p43, %p44
      %s46 = ssub.s32 %s17, %s24
      %p47 = scmp.eq.s32.totalorder %s46, 0
      %s49 = sadd.s32 %s48, 1
      %s50 = scalar_select %p47, %s48, %s49
      %p53 = pneg %p47
      %p54 = scmp.eq.s32.totalorder %s17, 1
      %p55 = por %p53, %p54
      %p56 = scmp.ne.s32.totalorder %s48, %s51
      %p57 = scmp.eq.s32.totalorder %s17, 0
      %p58 = por %p56, %p57
      %p59 = scmp.ne.s32.totalorder %s48, %s51
      %p60 = scmp.eq.s32.totalorder %s22, 1
      %p61 = por %p59, %p60
      %p62 = scmp.ne.s32.totalorder %s51, %s52
      %p63 = scmp.eq.s32.totalorder %s22, 0
      %p64 = por %p62, %p63
      %p65 = scmp.ne.s32.totalorder %s51, %s52
      %p66 = scmp.eq.s32.totalorder %s23, 1
      %p67 = por %p65, %p66
      %p69 = scmp.ne.s32.totalorder %s52, %s68
      %p70 = scmp.eq.s32.totalorder %s23, 0
      %p71 = por %p69, %p70
      %s73 = sadd.s32 %s72, 1
      %p76 = scmp.eq.s32.totalorder %s17, 1
      %p77 = scmp.ne.s32.totalorder %s72, %s74
      %p78 = scmp.eq.s32.totalorder %s17, 0
      %p79 = por %p77, %p78
      %p80 = scmp.ne.s32.totalorder %s72, %s74
      %p81 = scmp.eq.s32.totalorder %s22, 1
      %p82 = por %p80, %p81
      %p83 = scmp.ne.s32.totalorder %s74, %s75
      %p84 = scmp.eq.s32.totalorder %s22, 0
      %p85 = por %p83, %p84
      %p86 = scmp.ne.s32.totalorder %s74, %s75
      %p87 = scmp.eq.s32.totalorder %s23, 1
      %p88 = por %p86, %p87
      %p90 = scmp.ne.s32.totalorder %s75, %s89
      %p91 = scmp.eq.s32.totalorder %s23, 0
      %p92 = por %p90, %p91
      %s94 = sadd.s32 %s93, 1
      %p97 = scmp.eq.s32.totalorder %s17, 1
      %p98 = scmp.ne.s32.totalorder %s93, %s95
      %p99 = scmp.eq.s32.totalorder %s17, 0
      %p100 = por %p98, %p99
      %p101 = scmp.ne.s32.totalorder %s93, %s95
      %p102 = scmp.eq.s32.totalorder %s22, 1
      %p103 = por %p101, %p102
      %p104 = scmp.ne.s32.totalorder %s95, %s96
      %p105 = scmp.eq.s32.totalorder %s22, 0
      %p106 = por %p104, %p105
      %p107 = scmp.ne.s32.totalorder %s95, %s96
      %p108 = scmp.eq.s32.totalorder %s23, 1
      %p109 = por %p107, %p108
      %p111 = scmp.ne.s32.totalorder %s96, %s110
      %p112 = scmp.eq.s32.totalorder %s23, 0
      %p113 = por %p111, %p112
      %s115 = sadd.s32 %s114, 1
      %p118 = scmp.eq.s32.totalorder %s17, 1
      %p119 = scmp.ne.s32.totalorder %s114, %s116
      %p120 = scmp.eq.s32.totalorder %s17, 0
      %p121 = por %p119, %p120
      %p122 = scmp.ne.s32.totalorder %s114, %s116
      %p123 = scmp.eq.s32.totalorder %s22, 1
      %p124 = por %p122, %p123
      %p125 = scmp.ne.s32.totalorder %s116, %s117
      %p126 = scmp.eq.s32.totalorder %s22, 0
      %p127 = por %p125, %p126
      %p128 = scmp.ne.s32.totalorder %s116, %s117
      %p129 = scmp.eq.s32.totalorder %s23, 1
      %p130 = por %p128, %p129
      %p132 = scmp.ne.s32.totalorder %s117, %s131
      %p133 = scmp.eq.s32.totalorder %s23, 0
      %p134 = por %p132, %p133
      %s136 = sadd.s32 %s135, 1
      %p139 = scmp.eq.s32.totalorder %s17, 1
      %p140 = scmp.ne.s32.totalorder %s135, %s137
      %p141 = scmp.eq.s32.totalorder %s17, 0
      %p142 = por %p140, %p141
      %p143 = scmp.ne.s32.totalorder %s135, %s137
      %p144 = scmp.eq.s32.totalorder %s22, 1
      %p145 = por %p143, %p144
      %p146 = scmp.ne.s32.totalorder %s137, %s138
      %p147 = scmp.eq.s32.totalorder %s22, 0
      %p148 = por %p146, %p147
      %p149 = scmp.ne.s32.totalorder %s137, %s138
      %p150 = scmp.eq.s32.totalorder %s23, 1
      %p151 = por %p149, %p150
      %p153 = scmp.ne.s32.totalorder %s138, %s152
      %p154 = scmp.eq.s32.totalorder %s23, 0
      %p155 = por %p153, %p154
      %s157 = sadd.s32 %s156, 1
      %p160 = scmp.eq.s32.totalorder %s17, 1
      %p161 = scmp.ne.s32.totalorder %s156, %s158
      %p162 = scmp.eq.s32.totalorder %s17, 0
      %p163 = por %p161, %p162
      %p164 = scmp.ne.s32.totalorder %s156, %s158
      %p165 = scmp.eq.s32.totalorder %s22, 1
      %p166 = por %p164, %p165
      %p167 = scmp.ne.s32.totalorder %s158, %s159
      %p168 = scmp.eq.s32.totalorder %s22, 0
      %p169 = por %p167, %p168
      %p170 = scmp.ne.s32.totalorder %s158, %s159
      %p171 = scmp.eq.s32.totalorder %s23, 1
      %p172 = por %p170, %p171
      %p174 = scmp.ne.s32.totalorder %s159, %s173
      %p175 = scmp.eq.s32.totalorder %s23, 0
      %p176 = por %p174, %p175
      %s178 = sadd.s32 %s177, 1
      %p181 = scmp.eq.s32.totalorder %s17, 1
      %p182 = scmp.ne.s32.totalorder %s177, %s179
      %p183 = scmp.eq.s32.totalorder %s17, 0
      %p184 = por %p182, %p183
      %p185 = scmp.ne.s32.totalorder %s177, %s179
      %p186 = scmp.eq.s32.totalorder %s22, 1
      %p187 = por %p185, %p186
      %p188 = scmp.ne.s32.totalorder %s179, %s180
      %p189 = scmp.eq.s32.totalorder %s22, 0
      %p190 = por %p188, %p189
      %p191 = scmp.ne.s32.totalorder %s179, %s180
      %p192 = scmp.eq.s32.totalorder %s23, 1
      %p193 = por %p191, %p192
      %p195 = scmp.ne.s32.totalorder %s180, %s194
      %p196 = scmp.eq.s32.totalorder %s23, 0
      %p197 = por %p195, %p196
      %s199 = sadd.s32 %s198, 1
      %p202 = scmp.eq.s32.totalorder %s17, 1
      %p203 = scmp.ne.s32.totalorder %s198, %s200
      %p204 = scmp.eq.s32.totalorder %s17, 0
      %p205 = por %p203, %p204
      %p206 = scmp.ne.s32.totalorder %s198, %s200
      %p207 = scmp.eq.s32.totalorder %s22, 1
      %p208 = por %p206, %p207
      %p209 = scmp.ne.s32.totalorder %s200, %s201
      %p210 = scmp.eq.s32.totalorder %s22, 0
      %p211 = por %p209, %p210
      %p212 = scmp.ne.s32.totalorder %s200, %s201
      %p213 = scmp.eq.s32.totalorder %s23, 1
      %p214 = por %p212, %p213
      %p216 = scmp.ne.s32.totalorder %s201, %s215
      %p217 = scmp.eq.s32.totalorder %s23, 0
      %p218 = por %p216, %p217
      %s220 = sadd.s32 %s219, 1
      %p223 = scmp.eq.s32.totalorder %s17, 1
      %p224 = scmp.ne.s32.totalorder %s219, %s221
      %p225 = scmp.eq.s32.totalorder %s17, 0
      %p226 = por %p224, %p225
      %p227 = scmp.ne.s32.totalorder %s219, %s221
      %p228 = scmp.eq.s32.totalorder %s22, 1
      %p229 = por %p227, %p228
      %p230 = scmp.ne.s32.totalorder %s221, %s222
      %p231 = scmp.eq.s32.totalorder %s22, 0
      %p232 = por %p230, %p231
      %p233 = scmp.ne.s32.totalorder %s221, %s222
      %p234 = scmp.eq.s32.totalorder %s23, 1
      %p235 = por %p233, %p234
      %p237 = scmp.ne.s32.totalorder %s222, %s236
      %p238 = scmp.eq.s32.totalorder %s23, 0
      %p239 = por %p237, %p238
      %s240 = ssub.s32 %s17, %s24
      %p241 = scmp.eq.s32.totalorder %s240, 0
      %s243 = sadd.s32 %s242, 1
      %s244 = scalar_select %p241, %s242, %s243
      %p247 = pneg %p241
      %p248 = scmp.eq.s32.totalorder %s17, 1
      %p249 = por %p247, %p248
      %p250 = scmp.ne.s32.totalorder %s242, %s245
      %p251 = scmp.eq.s32.totalorder %s17, 0
      %p252 = por %p250, %p251
      %p253 = scmp.ne.s32.totalorder %s242, %s245
      %p254 = scmp.eq.s32.totalorder %s22, 1
      %p255 = por %p253, %p254
      %p256 = scmp.ne.s32.totalorder %s245, %s246
      %p257 = scmp.eq.s32.totalorder %s22, 0
      %p258 = por %p256, %p257
      %p259 = scmp.ne.s32.totalorder %s245, %s246
      %p260 = scmp.eq.s32.totalorder %s23, 1
      %p261 = por %p259, %p260
      %p263 = scmp.ne.s32.totalorder %s246, %s262
      %p264 = scmp.eq.s32.totalorder %s23, 0
      %p265 = por %p263, %p264
      %p266 = scmp.le.s32.totalorder 1, %s17
      %p267 = scmp.lt.s32.totalorder %s17, 3
      %p268 = pnand %p266, %p267
      %p269 = pneg %p268
      // Predicated region
      $region9: #{spiking_detr_forward.3} parent=5 // pred_check
        _
      $region10: #{spiking_detr_forward.3} parent=5 // pred_check_branch
        %271 = sbr.rel (%p268) target = $region12
      $region11: #{spiking_detr_forward.3} parent=5 // pred_region
        %s272 = ssub.s32 %s17, 1
        // Predicated region
        $region13: #{spiking_detr_forward.3} parent=11 // pred_check
          %p273 = pneg %p38
        $region14: #{spiking_detr_forward.3} parent=11 // pred_check_branch
          %275 = sbr.rel (%p273) target = $region16
        $region15: #{spiking_detr_forward.3} parent=11 // pred_region
          %s277 = ssub.s32 16, 16
          %278 = vsyncadd [#allocation4], %s277
          %s280 = sshll.u32 %s0, 4
          %s281 = int_to_ptr.vmem [resolvable:$true] %s280
          %283 = dma.vmem_to_smem %s281, 16, [#allocation3], [#allocation4]
        $region16: #{spiking_detr_forward.3} parent=11 // pred_fallthru
          _
        // Predicated region
        $region17: #{spiking_detr_forward.3} parent=11 // pred_check
          %p284 = pneg %p85
        $region18: #{spiking_detr_forward.3} parent=11 // pred_check_branch
          %286 = sbr.rel (%p284) target = $region20
        $region19: #{spiking_detr_forward.3} parent=11 // pred_region
          _
        $region20: #{spiking_detr_forward.3} parent=11 // pred_fallthru
          _
        // Predicated region
        $region21: #{spiking_detr_forward.3} parent=11 // pred_check
          %p287 = pneg %p106
        $region22: #{spiking_detr_forward.3} parent=11 // pred_check_branch
          %289 = sbr.rel (%p287) target = $region24
        $region23: #{spiking_detr_forward.3} parent=11 // pred_region
          _
        $region24: #{spiking_detr_forward.3} parent=11 // pred_fallthru
          _
        // Predicated region
        $region25: #{spiking_detr_forward.3} parent=11 // pred_check
          %p290 = pneg %p127
        $region26: #{spiking_detr_forward.3} parent=11 // pred_check_branch
          %292 = sbr.rel (%p290) target = $region28
        $region27: #{spiking_detr_forward.3} parent=11 // pred_region
          _
        $region28: #{spiking_detr_forward.3} parent=11 // pred_fallthru
          _
        // Predicated region
        $region29: #{spiking_detr_forward.3} parent=11 // pred_check
          %p293 = pneg %p148
        $region30: #{spiking_detr_forward.3} parent=11 // pred_check_branch
          %295 = sbr.rel (%p293) target = $region32
        $region31: #{spiking_detr_forward.3} parent=11 // pred_region
          _
        $region32: #{spiking_detr_forward.3} parent=11 // pred_fallthru
          _
        // Predicated region
        $region33: #{spiking_detr_forward.3} parent=11 // pred_check
          %p296 = pneg %p169
        $region34: #{spiking_detr_forward.3} parent=11 // pred_check_branch
          %298 = sbr.rel (%p296) target = $region36
        $region35: #{spiking_detr_forward.3} parent=11 // pred_region
          _
        $region36: #{spiking_detr_forward.3} parent=11 // pred_fallthru
          _
        // Predicated region
        $region37: #{spiking_detr_forward.3} parent=11 // pred_check
          %p299 = pneg %p190
        $region38: #{spiking_detr_forward.3} parent=11 // pred_check_branch
          %301 = sbr.rel (%p299) target = $region40
        $region39: #{spiking_detr_forward.3} parent=11 // pred_region
          _
        $region40: #{spiking_detr_forward.3} parent=11 // pred_fallthru
          _
        // Predicated region
        $region41: #{spiking_detr_forward.3} parent=11 // pred_check
          %p302 = pneg %p211
        $region42: #{spiking_detr_forward.3} parent=11 // pred_check_branch
          %304 = sbr.rel (%p302) target = $region44
        $region43: #{spiking_detr_forward.3} parent=11 // pred_region
          _
        $region44: #{spiking_detr_forward.3} parent=11 // pred_fallthru
          _
        // Predicated region
        $region45: #{spiking_detr_forward.3} parent=11 // pred_check
          %p305 = pneg %p232
        $region46: #{spiking_detr_forward.3} parent=11 // pred_check_branch
          %307 = sbr.rel (%p305) target = $region48
        $region47: #{spiking_detr_forward.3} parent=11 // pred_region
          _
        $region48: #{spiking_detr_forward.3} parent=11 // pred_fallthru
          _
      $region12: #{spiking_detr_forward.3} parent=5 // pred_fallthru
        _
      %p308 = scmp.lt.s32.totalorder %s17, 2
      // Predicated region
      $region49: #{spiking_detr_forward.3} parent=5 // pred_check
        %p309 = pneg %p308
      $region50: #{spiking_detr_forward.3} parent=5 // pred_check_branch
        %311 = sbr.rel (%p309) target = $region52
      $region51: #{spiking_detr_forward.3} parent=5 // pred_region
        // Predicated region
        $region53: #{spiking_detr_forward.3} parent=51 // pred_check
          %p312 = pneg %p58
        $region54: #{spiking_detr_forward.3} parent=51 // pred_check_branch
          %314 = sbr.rel (%p312) target = $region56
        $region55: #{spiking_detr_forward.3} parent=51 // pred_region
          %p315 = scmp.lt.s32.totalorder %s17, 1
          %s316 = scalar_select %p315, %s17, 1
          %s317 = smul.addr %s316, 8
          %s318 = smul.addr %s317, 4
          %s319 = scalar_lea.vmem %s1, %s318
        $region56: #{spiking_detr_forward.3} parent=51 // pred_fallthru
          _
      $region52: #{spiking_detr_forward.3} parent=5 // pred_fallthru
        _
      %p320 = scmp.le.s32.totalorder 1, %s17
      %p321 = scmp.lt.s32.totalorder %s17, 3
      %p322 = pnand %p320, %p321
      %p323 = pneg %p322
      // Predicated region
      $region57: #{spiking_detr_forward.3} parent=5 // pred_check
        _
      $region58: #{spiking_detr_forward.3} parent=5 // pred_check_branch
        %325 = sbr.rel (%p322) target = $region60
      $region59: #{spiking_detr_forward.3} parent=5 // pred_region
        %s326 = ssub.s32 %s17, 1
        // Predicated region
        $region61: #{spiking_detr_forward.3} parent=59 // pred_check
          %p327 = pneg %p38
        $region62: #{spiking_detr_forward.3} parent=59 // pred_check_branch
          %329 = sbr.rel (%p327) target = $region64
        $region63: #{spiking_detr_forward.3} parent=59 // pred_region
          %330 = dma.done [#allocation4], 16
        $region64: #{spiking_detr_forward.3} parent=59 // pred_fallthru
          _
        %331 = sfence
        %p332 = pneg %p38
        %p333 = pneg %p35
        %p334 = scmp.lt.s32.totalorder %s22, 1
        %s335 = scalar_select %p334, %s22, 1
        %s336 = smul.addr %s335, 8
        %s337 = smul.addr %s336, 4
        %s338 = scalar_lea.vmem %s1, %s337
        %p339 = pneg %p64
        %p340 = pneg %p61
        %p341 = pneg %p85
        %p342 = pneg %p82
        %p343 = pneg %p106
        %p344 = pneg %p103
        %p345 = pneg %p127
        %p346 = pneg %p124
        %p347 = pneg %p148
        %p348 = pneg %p145
        %p349 = pneg %p169
        %p350 = pneg %p166
        %p351 = pneg %p190
        %p352 = pneg %p187
        %p353 = pneg %p211
        %p354 = pneg %p208
        %p355 = pneg %p232
        %p356 = pneg %p229
        %p357 = pneg %p258
        %p358 = pneg %p255
        %p359 = scmp.lt.s32.totalorder %s22, 1
        %s360 = scalar_select %p359, %s22, 1
        %s361 = smul.addr %s360, 2
        %s362 = smul.addr %s361, 8
        %s363 = scalar_lea.vmem %s10, %s362
        %p364 = scmp.lt.s32.totalorder %s22, 1
        %s365 = scalar_select %p364, %s22, 1
        %s366 = smul.addr %s365, 8
        %s367 = smul.addr %s366, 4
        %s368 = scalar_lea.vmem %s1, %s367
        %p369 = scmp.lt.s32.totalorder %s22, 1
        %s370 = scalar_select %p369, %s22, 1
        %s371 = smul.addr %s370, 2
        %s372 = smul.addr %s371, 8
        %s373 = scalar_lea.vmem %s10, %s372
        %s375 = sld [smem:[#allocation3]]
        %s376 = sld [smem:[#allocation3 + $0x1]]
        %s377 = sld [smem:[#allocation3 + $0x2]]
        %s378 = sld [smem:[#allocation3 + $0x3]]
        %s379 = sld [smem:[#allocation3 + $0x4]]
        %v380 = vld [vmem:[%s368] sm:$0xf]
        %v381 = vld [vmem:[%s368 + $0x4] sm:$0xf]
        %v382 = vunpack.c.l.bf16 %v380
        %v383 = vunpack.c.l.bf16 %v381
        %v384 = vstv %s375
        %v385 = vmul.f32 %v382, %v384
        %v386 = vmul.f32 %v383, %v384
        %v387 = vadd.f32 %v385, 0.0
        %v388 = vadd.f32 %v386, 0.0
        %v389 = vstv %s379
        %vm390 = vcmp.ge.f32.partialorder %v387, %v389
        %vm391 = vcmp.ge.f32.partialorder %v388, %v389
        %v392 = vsel %vm390, 1, 0
        %v393 = vsel %vm391, 1, 0
        %v394 = vcvt.s32.f32 %v392
        %v395 = vcvt.s32.f32 %v393
        %v396 = vsub.f32 1.0, %v394
        %v397 = vsub.f32 1.0, %v395
        %v398 = vmul.f32 %v387, %v396
        %v399 = vmul.f32 %v388, %v397
        %v400 = vadd.f32 %v394, 0.0
        %v401 = vadd.f32 %v395, 0.0
        %v402 = vstv %s376
        %v403 = vmul.f32 %v382, %v402
        %v404 = vmul.f32 %v383, %v402
        %v405 = vadd.f32 %v403, 0.0
        %v406 = vadd.f32 %v404, 0.0
        %vm407 = vcmp.ge.f32.partialorder %v405, %v389
        %vm408 = vcmp.ge.f32.partialorder %v406, %v389
        %v409 = vsel %vm407, 1, 0
        %v410 = vsel %vm408, 1, 0
        %v411 = vcvt.s32.f32 %v409
        %v412 = vcvt.s32.f32 %v410
        %v413 = vsub.f32 1.0, %v411
        %v414 = vsub.f32 1.0, %v412
        %v415 = vmul.f32 %v405, %v413
        %v416 = vmul.f32 %v406, %v414
        %417 = vst [vmem:[#allocation2] sm:$0xff] %v411
        %418 = vst [vmem:[#allocation2 + $0x8] sm:$0xff] %v412
        %s419 = scalar_lea.vmem %s368, 8
        %v420 = vld [vmem:[%s419] sm:$0xf]
        %v421 = vld [vmem:[%s419 + $0x4] sm:$0xf]
        %v422 = vunpack.c.l.bf16 %v420
        %v423 = vunpack.c.l.bf16 %v421
        %v424 = vsub.f32 %v422, %v398
        %v425 = vsub.f32 %v423, %v399
        %v426 = vmul.f32 %v424, %v384
        %v427 = vmul.f32 %v425, %v384
        %v428 = vadd.f32 %v398, %v426
        %v429 = vadd.f32 %v399, %v427
        %vm430 = vcmp.ge.f32.partialorder %v428, %v389
        %vm431 = vcmp.ge.f32.partialorder %v429, %v389
        %v432 = vsel %vm430, 1, 0
        %v433 = vsel %vm431, 1, 0
        %v434 = vcvt.s32.f32 %v432
        %v435 = vcvt.s32.f32 %v433
        %v436 = vsub.f32 1.0, %v434
        %v437 = vsub.f32 1.0, %v435
        %v438 = vmul.f32 %v428, %v436
        %v439 = vmul.f32 %v429, %v437
        %v440 = vadd.f32 %v400, %v434
        %v441 = vadd.f32 %v401, %v435
        %v442 = vsub.f32 %v422, %v415
        %v443 = vsub.f32 %v423, %v416
        %v444 = vmul.f32 %v442, %v402
        %v445 = vmul.f32 %v443, %v402
        %v446 = vadd.f32 %v415, %v444
        %v447 = vadd.f32 %v416, %v445
        %vm448 = vcmp.ge.f32.partialorder %v446, %v389
        %vm449 = vcmp.ge.f32.partialorder %v447, %v389
        %v450 = vsel %vm448, 1, 0
        %v451 = vsel %vm449, 1, 0
        %v452 = vcvt.s32.f32 %v450
        %v453 = vcvt.s32.f32 %v451
        %v454 = vsub.f32 1.0, %v452
        %v455 = vsub.f32 1.0, %v453
        %v456 = vmul.f32 %v446, %v454
        %v457 = vmul.f32 %v447, %v455
        %458 = vst [vmem:[#allocation2 + $0x10] sm:$0xff] %v452
        %459 = vst [vmem:[#allocation2 + $0x18] sm:$0xff] %v453
        %s460 = scalar_lea.vmem %s368, 16
        %v461 = vld [vmem:[%s460] sm:$0xf]
        %v462 = vld [vmem:[%s460 + $0x4] sm:$0xf]
        %v463 = vunpack.c.l.bf16 %v461
        %v464 = vunpack.c.l.bf16 %v462
        %v465 = vsub.f32 %v463, %v438
        %v466 = vsub.f32 %v464, %v439
        %v467 = vmul.f32 %v465, %v384
        %v468 = vmul.f32 %v466, %v384
        %v469 = vadd.f32 %v438, %v467
        %v470 = vadd.f32 %v439, %v468
        %vm471 = vcmp.ge.f32.partialorder %v469, %v389
        %vm472 = vcmp.ge.f32.partialorder %v470, %v389
        %v473 = vsel %vm471, 1, 0
        %v474 = vsel %vm472, 1, 0
        %v475 = vcvt.s32.f32 %v473
        %v476 = vcvt.s32.f32 %v474
        %v477 = vsub.f32 1.0, %v475
        %v478 = vsub.f32 1.0, %v476
        %v479 = vmul.f32 %v469, %v477
        %v480 = vmul.f32 %v470, %v478
        %v481 = vadd.f32 %v440, %v475
        %v482 = vadd.f32 %v441, %v476
        %v483 = vsub.f32 %v463, %v456
        %v484 = vsub.f32 %v464, %v457
        %v485 = vmul.f32 %v483, %v402
        %v486 = vmul.f32 %v484, %v402
        %v487 = vadd.f32 %v456, %v485
        %v488 = vadd.f32 %v457, %v486
        %vm489 = vcmp.ge.f32.partialorder %v487, %v389
        %vm490 = vcmp.ge.f32.partialorder %v488, %v389
        %v491 = vsel %vm489, 1, 0
        %v492 = vsel %vm490, 1, 0
        %v493 = vcvt.s32.f32 %v491
        %v494 = vcvt.s32.f32 %v492
        %v495 = vsub.f32 1.0, %v493
        %v496 = vsub.f32 1.0, %v494
        %v497 = vmul.f32 %v487, %v495
        %v498 = vmul.f32 %v488, %v496
        %499 = vst [vmem:[#allocation2 + $0x20] sm:$0xff] %v493
        %500 = vst [vmem:[#allocation2 + $0x28] sm:$0xff] %v494
        %s501 = scalar_lea.vmem %s368, 24
        %v502 = vld [vmem:[%s501] sm:$0xf]
        %v503 = vld [vmem:[%s501 + $0x4] sm:$0xf]
        %v504 = vunpack.c.l.bf16 %v502
        %v505 = vunpack.c.l.bf16 %v503
        %v506 = vsub.f32 %v504, %v479
        %v507 = vsub.f32 %v505, %v480
        %v508 = vmul.f32 %v506, %v384
        %v509 = vmul.f32 %v507, %v384
        %v510 = vadd.f32 %v479, %v508
        %v511 = vadd.f32 %v480, %v509
        %vm512 = vcmp.ge.f32.partialorder %v510, %v389
        %vm513 = vcmp.ge.f32.partialorder %v511, %v389
        %v514 = vsel %vm512, 1, 0
        %v515 = vsel %vm513, 1, 0
        %v516 = vcvt.s32.f32 %v514
        %v517 = vcvt.s32.f32 %v515
        %v518 = vadd.f32 %v481, %v516
        %v519 = vadd.f32 %v482, %v517
        %v520 = vsub.f32 %v504, %v497
        %v521 = vsub.f32 %v505, %v498
        %v522 = vmul.f32 %v520, %v402
        %v523 = vmul.f32 %v521, %v402
        %v524 = vadd.f32 %v497, %v522
        %v525 = vadd.f32 %v498, %v523
        %vm526 = vcmp.ge.f32.partialorder %v524, %v389
        %vm527 = vcmp.ge.f32.partialorder %v525, %v389
        %v528 = vsel %vm526, 1, 0
        %v529 = vsel %vm527, 1, 0
        %v530 = vcvt.s32.f32 %v528
        %v531 = vcvt.s32.f32 %v529
        %532 = vst [vmem:[#allocation2 + $0x30] sm:$0xff] %v530
        %533 = vst [vmem:[#allocation2 + $0x38] sm:$0xff] %v531
        %v534 = vmul.f32 %v518, 0.25
        %v535 = vmul.f32 %v519, 0.25
        %v536 = vpack.c.bf16 %v535, %v534
        %v537 = vld [vmem:[%s2] sm:$0xff]
        %v538 = vld [vmem:[%s2 + $0x8] sm:$0xff]
        %v539 = vld [vmem:[%s2 + $0x10] sm:$0xff]
        %v540 = vld [vmem:[%s2 + $0x18] sm:$0xff]
        %v541 = vld [vmem:[%s2 + $0x20] sm:$0xff]
        %v542 = vld [vmem:[%s2 + $0x28] sm:$0xff]
        %v543 = vld [vmem:[%s2 + $0x30] sm:$0xff]
        %v544 = vld [vmem:[%s2 + $0x38] sm:$0xff]
        %v545 = vld [vmem:[%s2 + $0x40] sm:$0xff]
        %v546 = vld [vmem:[%s2 + $0x48] sm:$0xff]
        %v547 = vld [vmem:[%s2 + $0x50] sm:$0xff]
        %v548 = vld [vmem:[%s2 + $0x58] sm:$0xff]
        %v549 = vld [vmem:[%s2 + $0x60] sm:$0xff]
        %v550 = vld [vmem:[%s2 + $0x68] sm:$0xff]
        %v551 = vld [vmem:[%s2 + $0x70] sm:$0xff]
        %v552 = vld [vmem:[%s2 + $0x78] sm:$0xff]
        %v553 = vpack.c.bf16 %v538, %v537
        %v554 = vpack.c.bf16 %v540, %v539
        %v555 = vpack.c.bf16 %v542, %v541
        %v556 = vpack.c.bf16 %v544, %v543
        %v557 = vpack.c.bf16 %v546, %v545
        %v558 = vpack.c.bf16 %v548, %v547
        %v559 = vpack.c.bf16 %v550, %v549
        %v560 = vpack.c.bf16 %v552, %v551
        %v561 = vld [vmem:[%s3] sm:$0x1]
        %v563 = vlaneseq
        %v564 = vshrl.u32 %v563, 7
        %v565 = vsub.s32 0, %v564
        %v566 = vrot.slane %v561, %v565
        %568 = vmatprep.subr.bf16.mxu0 0
        %569 = vmatpush1.bf16.msra.mxu0 %v560
        %570 = vmatprep.subr.bf16.mxu0 0
        %571 = vmatpush1.bf16.msra.mxu0 %v559
        %572 = vmatprep.subr.bf16.mxu0 0
        %573 = vmatpush1.bf16.msra.mxu0 %v558
        %574 = vmatprep.subr.bf16.mxu0 0
        %575 = vmatpush1.bf16.msra.mxu0 %v557
        %576 = vmatprep.subr.bf16.mxu0 0
        %577 = vmatpush1.bf16.msra.mxu0 %v556
        %578 = vmatprep.subr.bf16.mxu0 0
        %579 = vmatpush1.bf16.msra.mxu0 %v555
        %580 = vmatprep.subr.bf16.mxu0 0
        %581 = vmatpush1.bf16.msra.mxu0 %v554
        %582 = vmatprep.subr.bf16.mxu0 0
        %583 = vmatpush1.bf16.msra.mxu0 %v553
        %584 = vmatprep.subr.bf16.mxu0 0
        %585 = vmatpush2.bf16.msra.mxu0 0
        %586 = vmatprep.subr.bf16.mxu0 0
        %587 = vmatpush2.bf16.msra.mxu0 0
        %588 = vmatprep.subr.bf16.mxu0 0
        %589 = vmatpush2.bf16.msra.mxu0 0
        %590 = vmatprep.subr.bf16.mxu0 0
        %591 = vmatpush2.bf16.msra.mxu0 0
        %592 = vmatprep.subr.bf16.mxu0 0
        %593 = vmatpush2.bf16.msra.mxu0 0
        %594 = vmatprep.subr.bf16.mxu0 0
        %595 = vmatpush2.bf16.msra.mxu0 0
        %596 = vmatprep.subr.bf16.mxu0 0
        %597 = vmatpush2.bf16.msra.mxu0 0
        %598 = vmatprep.subr.bf16.mxu0 0
        %599 = vmatpush2.bf16.msra.mxu0 0
        %600 = vmatprep.mubr.bf16.mxu0 0
        %601 = vmatmul.mubr.bf16.gmra.mxu0 %v536
        %v602 = vpop.f32.mrf.mxu0
        %v603 = vadd.f32 %v566, %v602
        %v604 = vpop.f32.mrf.mxu0
        %v605 = vpop.f32.mrf.mxu0
        %v606 = vadd.f32 %v566, %v605
        %v607 = vpop.f32.mrf.mxu0
        %608 = vdwg.mxu0
        %v609 = vld [vmem:[#allocation2] sm:$0xff]
        %v610 = vld [vmem:[#allocation2 + $0x8] sm:$0xff]
        %v611 = vld [vmem:[#allocation2 + $0x10] sm:$0xff]
        %v612 = vld [vmem:[#allocation2 + $0x18] sm:$0xff]
        %v613 = vld [vmem:[#allocation2 + $0x20] sm:$0xff]
        %v614 = vld [vmem:[#allocation2 + $0x28] sm:$0xff]
        %v615 = vld [vmem:[#allocation2 + $0x30] sm:$0xff]
        %v616 = vld [vmem:[#allocation2 + $0x38] sm:$0xff]
        %v617 = vpack.c.bf16 %v610, %v609
        %v618 = vpack.c.bf16 %v612, %v611
        %v619 = vpack.c.bf16 %v614, %v613
        %v620 = vpack.c.bf16 %v616, %v615
        %v621 = vld [vmem:[%s4] sm:$0xff]
        %v622 = vld [vmem:[%s4 + $0x8] sm:$0xff]
        %v623 = vld [vmem:[%s4 + $0x10] sm:$0xff]
        %v624 = vld [vmem:[%s4 + $0x18] sm:$0xff]
        %v625 = vld [vmem:[%s4 + $0x20] sm:$0xff]
        %v626 = vld [vmem:[%s4 + $0x28] sm:$0xff]
        %v627 = vld [vmem:[%s4 + $0x30] sm:$0xff]
        %v628 = vld [vmem:[%s4 + $0x38] sm:$0xff]
        %v629 = vld [vmem:[%s4 + $0x40] sm:$0xff]
        %v630 = vld [vmem:[%s4 + $0x48] sm:$0xff]
        %v631 = vld [vmem:[%s4 + $0x50] sm:$0xff]
        %v632 = vld [vmem:[%s4 + $0x58] sm:$0xff]
        %v633 = vld [vmem:[%s4 + $0x60] sm:$0xff]
        %v634 = vld [vmem:[%s4 + $0x68] sm:$0xff]
        %v635 = vld [vmem:[%s4 + $0x70] sm:$0xff]
        %v636 = vld [vmem:[%s4 + $0x78] sm:$0xff]
        %v637 = vpack.c.bf16 %v622, %v621
        %v638 = vpack.c.bf16 %v624, %v623
        %v639 = vpack.c.bf16 %v626, %v625
        %v640 = vpack.c.bf16 %v628, %v627
        %v641 = vpack.c.bf16 %v630, %v629
        %v642 = vpack.c.bf16 %v632, %v631
        %v643 = vpack.c.bf16 %v634, %v633
        %v644 = vpack.c.bf16 %v636, %v635
        %v645 = vld [vmem:[%s5] sm:$0x1]
        %v647 = vlaneseq
        %v648 = vshrl.u32 %v647, 7
        %v649 = vsub.s32 0, %v648
        %v650 = vrot.slane %v645, %v649
        %652 = vmatprep.subr.bf16.mxu0 0
        %653 = vmatpush1.bf16.msra.mxu0 %v644
        %654 = vmatprep.subr.bf16.mxu0 0
        %655 = vmatpush1.bf16.msra.mxu0 %v643
        %656 = vmatprep.subr.bf16.mxu0 0
        %657 = vmatpush1.bf16.msra.mxu0 %v642
        %658 = vmatprep.subr.bf16.mxu0 0
        %659 = vmatpush1.bf16.msra.mxu0 %v641
        %660 = vmatprep.subr.bf16.mxu0 0
        %661 = vmatpush1.bf16.msra.mxu0 %v640
        %662 = vmatprep.subr.bf16.mxu0 0
        %663 = vmatpush1.bf16.msra.mxu0 %v639
        %664 = vmatprep.subr.bf16.mxu0 0
        %665 = vmatpush1.bf16.msra.mxu0 %v638
        %666 = vmatprep.subr.bf16.mxu0 0
        %667 = vmatpush1.bf16.msra.mxu0 %v637
        %668 = vmatprep.subr.bf16.mxu0 0
        %669 = vmatpush2.bf16.msra.mxu0 0
        %670 = vmatprep.subr.bf16.mxu0 0
        %671 = vmatpush2.bf16.msra.mxu0 0
        %672 = vmatprep.subr.bf16.mxu0 0
        %673 = vmatpush2.bf16.msra.mxu0 0
        %674 = vmatprep.subr.bf16.mxu0 0
        %675 = vmatpush2.bf16.msra.mxu0 0
        %676 = vmatprep.subr.bf16.mxu0 0
        %677 = vmatpush2.bf16.msra.mxu0 0
        %678 = vmatprep.subr.bf16.mxu0 0
        %679 = vmatpush2.bf16.msra.mxu0 0
        %680 = vmatprep.subr.bf16.mxu0 0
        %681 = vmatpush2.bf16.msra.mxu0 0
        %682 = vmatprep.subr.bf16.mxu0 0
        %683 = vmatpush2.bf16.msra.mxu0 0
        %684 = vmatprep.mubr.bf16.mxu0 0
        %685 = vmatmul.mubr.bf16.gmra.mxu0 %v617
        %v686 = vpop.f32.mrf.mxu0
        %v687 = vadd.f32 %v650, %v686
        %v688 = vpop.f32.mrf.mxu0
        %v689 = vpop.f32.mrf.mxu0
        %v690 = vadd.f32 %v650, %v689
        %v691 = vpop.f32.mrf.mxu0
        %692 = vmatprep.mubr.bf16.mxu0 0
        %693 = vmatmul.mubr.bf16.gmra.mxu0 %v618
        %v694 = vpop.f32.mrf.mxu0
        %v695 = vadd.f32 %v650, %v694
        %v696 = vpop.f32.mrf.mxu0
        %v697 = vpop.f32.mrf.mxu0
        %v698 = vadd.f32 %v650, %v697
        %v699 = vpop.f32.mrf.mxu0
        %700 = vmatprep.mubr.bf16.mxu0 0
        %701 = vmatmul.mubr.bf16.gmra.mxu0 %v619
        %v702 = vpop.f32.mrf.mxu0
        %v703 = vadd.f32 %v650, %v702
        %v704 = vpop.f32.mrf.mxu0
        %v705 = vpop.f32.mrf.mxu0
        %v706 = vadd.f32 %v650, %v705
        %v707 = vpop.f32.mrf.mxu0
        %708 = vmatprep.mubr.bf16.mxu0 0
        %709 = vmatmul.mubr.bf16.gmra.mxu0 %v620
        %v710 = vpop.f32.mrf.mxu0
        %v711 = vadd.f32 %v650, %v710
        %v712 = vpop.f32.mrf.mxu0
        %v713 = vpop.f32.mrf.mxu0
        %v714 = vadd.f32 %v650, %v713
        %v715 = vpop.f32.mrf.mxu0
        %716 = vdwg.mxu0
        %v717 = vstv %s377
        %v718 = vmul.f32 %v687, %v717
        %v719 = vmul.f32 %v690, %v717
        %v720 = vadd.f32 %v718, 0.0
        %v721 = vadd.f32 %v719, 0.0
        %vm722 = vcmp.ge.f32.partialorder %v720, %v389
        %vm723 = vcmp.ge.f32.partialorder %v721, %v389
        %v724 = vsel %vm722, 1, 0
        %v725 = vsel %vm723, 1, 0
        %v726 = vcvt.s32.f32 %v724
        %v727 = vcvt.s32.f32 %v725
        %v728 = vsub.f32 1.0, %v726
        %v729 = vsub.f32 1.0, %v727
        %v730 = vmul.f32 %v720, %v728
        %v731 = vmul.f32 %v721, %v729
        %732 = vst [vmem:[#allocation2] sm:$0xff] %v726
        %733 = vst [vmem:[#allocation2 + $0x8] sm:$0xff] %v727
        %v734 = vsub.f32 %v695, %v730
        %v735 = vsub.f32 %v698, %v731
        %v736 = vmul.f32 %v734, %v717
        %v737 = vmul.f32 %v735, %v717
        %v738 = vadd.f32 %v730, %v736
        %v739 = vadd.f32 %v731, %v737
        %vm740 = vcmp.ge.f32.partialorder %v738, %v389
        %vm741 = vcmp.ge.f32.partialorder %v739, %v389
        %v742 = vsel %vm740, 1, 0
        %v743 = vsel %vm741, 1, 0
        %v744 = vcvt.s32.f32 %v742
        %v745 = vcvt.s32.f32 %v743
        %v746 = vsub.f32 1.0, %v744
        %v747 = vsub.f32 1.0, %v745
        %v748 = vmul.f32 %v738, %v746
        %v749 = vmul.f32 %v739, %v747
        %750 = vst [vmem:[#allocation2 + $0x10] sm:$0xff] %v744
        %751 = vst [vmem:[#allocation2 + $0x18] sm:$0xff] %v745
        %v752 = vsub.f32 %v703, %v748
        %v753 = vsub.f32 %v706, %v749
        %v754 = vmul.f32 %v752, %v717
        %v755 = vmul.f32 %v753, %v717
        %v756 = vadd.f32 %v748, %v754
        %v757 = vadd.f32 %v749, %v755
        %vm758 = vcmp.ge.f32.partialorder %v756, %v389
        %vm759 = vcmp.ge.f32.partialorder %v757, %v389
        %v760 = vsel %vm758, 1, 0
        %v761 = vsel %vm759, 1, 0
        %v762 = vcvt.s32.f32 %v760
        %v763 = vcvt.s32.f32 %v761
        %v764 = vsub.f32 1.0, %v762
        %v765 = vsub.f32 1.0, %v763
        %v766 = vmul.f32 %v756, %v764
        %v767 = vmul.f32 %v757, %v765
        %768 = vst [vmem:[#allocation2 + $0x20] sm:$0xff] %v762
        %769 = vst [vmem:[#allocation2 + $0x28] sm:$0xff] %v763
        %v770 = vsub.f32 %v711, %v766
        %v771 = vsub.f32 %v714, %v767
        %v772 = vmul.f32 %v770, %v717
        %v773 = vmul.f32 %v771, %v717
        %v774 = vadd.f32 %v766, %v772
        %v775 = vadd.f32 %v767, %v773
        %vm776 = vcmp.ge.f32.partialorder %v774, %v389
        %vm777 = vcmp.ge.f32.partialorder %v775, %v389
        %v778 = vsel %vm776, 1, 0
        %v779 = vsel %vm777, 1, 0
        %v780 = vcvt.s32.f32 %v778
        %v781 = vcvt.s32.f32 %v779
        %782 = vst [vmem:[#allocation2 + $0x30] sm:$0xff] %v780
        %783 = vst [vmem:[#allocation2 + $0x38] sm:$0xff] %v781
        %v784 = vld [vmem:[#allocation2] sm:$0xff]
        %v785 = vld [vmem:[#allocation2 + $0x8] sm:$0xff]
        %v786 = vld [vmem:[#allocation2 + $0x10] sm:$0xff]
        %v787 = vld [vmem:[#allocation2 + $0x18] sm:$0xff]
        %v788 = vld [vmem:[#allocation2 + $0x20] sm:$0xff]
        %v789 = vld [vmem:[#allocation2 + $0x28] sm:$0xff]
        %v790 = vld [vmem:[#allocation2 + $0x30] sm:$0xff]
        %v791 = vld [vmem:[#allocation2 + $0x38] sm:$0xff]
        %v792 = vpack.c.bf16 %v785, %v784
        %v793 = vpack.c.bf16 %v787, %v786
        %v794 = vpack.c.bf16 %v789, %v788
        %v795 = vpack.c.bf16 %v791, %v790
        %v796 = vld [vmem:[%s6] sm:$0xff]
        %v797 = vld [vmem:[%s6 + $0x8] sm:$0xff]
        %v798 = vld [vmem:[%s6 + $0x10] sm:$0xff]
        %v799 = vld [vmem:[%s6 + $0x18] sm:$0xff]
        %v800 = vld [vmem:[%s6 + $0x20] sm:$0xff]
        %v801 = vld [vmem:[%s6 + $0x28] sm:$0xff]
        %v802 = vld [vmem:[%s6 + $0x30] sm:$0xff]
        %v803 = vld [vmem:[%s6 + $0x38] sm:$0xff]
        %v804 = vld [vmem:[%s6 + $0x40] sm:$0xff]
        %v805 = vld [vmem:[%s6 + $0x48] sm:$0xff]
        %v806 = vld [vmem:[%s6 + $0x50] sm:$0xff]
        %v807 = vld [vmem:[%s6 + $0x58] sm:$0xff]
        %v808 = vld [vmem:[%s6 + $0x60] sm:$0xff]
        %v809 = vld [vmem:[%s6 + $0x68] sm:$0xff]
        %v810 = vld [vmem:[%s6 + $0x70] sm:$0xff]
        %v811 = vld [vmem:[%s6 + $0x78] sm:$0xff]
        %v812 = vpack.c.bf16 %v797, %v796
        %v813 = vpack.c.bf16 %v799, %v798
        %v814 = vpack.c.bf16 %v801, %v800
        %v815 = vpack.c.bf16 %v803, %v802
        %v816 = vpack.c.bf16 %v805, %v804
        %v817 = vpack.c.bf16 %v807, %v806
        %v818 = vpack.c.bf16 %v809, %v808
        %v819 = vpack.c.bf16 %v811, %v810
        %v820 = vld [vmem:[%s7] sm:$0x1]
        %v822 = vlaneseq
        %v823 = vshrl.u32 %v822, 7
        %v824 = vsub.s32 0, %v823
        %v825 = vrot.slane %v820, %v824
        %827 = vmatprep.subr.bf16.mxu0 0
        %828 = vmatpush1.bf16.msra.mxu0 %v819
        %829 = vmatprep.subr.bf16.mxu0 0
        %830 = vmatpush1.bf16.msra.mxu0 %v818
        %831 = vmatprep.subr.bf16.mxu0 0
        %832 = vmatpush1.bf16.msra.mxu0 %v817
        %833 = vmatprep.subr.bf16.mxu0 0
        %834 = vmatpush1.bf16.msra.mxu0 %v816
        %835 = vmatprep.subr.bf16.mxu0 0
        %836 = vmatpush1.bf16.msra.mxu0 %v815
        %837 = vmatprep.subr.bf16.mxu0 0
        %838 = vmatpush1.bf16.msra.mxu0 %v814
        %839 = vmatprep.subr.bf16.mxu0 0
        %840 = vmatpush1.bf16.msra.mxu0 %v813
        %841 = vmatprep.subr.bf16.mxu0 0
        %842 = vmatpush1.bf16.msra.mxu0 %v812
        %843 = vmatprep.subr.bf16.mxu0 0
        %844 = vmatpush2.bf16.msra.mxu0 0
        %845 = vmatprep.subr.bf16.mxu0 0
        %846 = vmatpush2.bf16.msra.mxu0 0
        %847 = vmatprep.subr.bf16.mxu0 0
        %848 = vmatpush2.bf16.msra.mxu0 0
        %849 = vmatprep.subr.bf16.mxu0 0
        %850 = vmatpush2.bf16.msra.mxu0 0
        %851 = vmatprep.subr.bf16.mxu0 0
        %852 = vmatpush2.bf16.msra.mxu0 0
        %853 = vmatprep.subr.bf16.mxu0 0
        %854 = vmatpush2.bf16.msra.mxu0 0
        %855 = vmatprep.subr.bf16.mxu0 0
        %856 = vmatpush2.bf16.msra.mxu0 0
        %857 = vmatprep.subr.bf16.mxu0 0
        %858 = vmatpush2.bf16.msra.mxu0 0
        %859 = vmatprep.mubr.bf16.mxu0 0
        %860 = vmatmul.mubr.bf16.gmra.mxu0 %v792
        %v861 = vpop.f32.mrf.mxu0
        %v862 = vadd.f32 %v825, %v861
        %v863 = vpop.f32.mrf.mxu0
        %v864 = vpop.f32.mrf.mxu0
        %v865 = vadd.f32 %v825, %v864
        %v866 = vpop.f32.mrf.mxu0
        %867 = vmatprep.mubr.bf16.mxu0 0
        %868 = vmatmul.mubr.bf16.gmra.mxu0 %v793
        %v869 = vpop.f32.mrf.mxu0
        %v870 = vadd.f32 %v825, %v869
        %v871 = vpop.f32.mrf.mxu0
        %v872 = vpop.f32.mrf.mxu0
        %v873 = vadd.f32 %v825, %v872
        %v874 = vpop.f32.mrf.mxu0
        %875 = vmatprep.mubr.bf16.mxu0 0
        %876 = vmatmul.mubr.bf16.gmra.mxu0 %v794
        %v877 = vpop.f32.mrf.mxu0
        %v878 = vadd.f32 %v825, %v877
        %v879 = vpop.f32.mrf.mxu0
        %v880 = vpop.f32.mrf.mxu0
        %v881 = vadd.f32 %v825, %v880
        %v882 = vpop.f32.mrf.mxu0
        %883 = vmatprep.mubr.bf16.mxu0 0
        %884 = vmatmul.mubr.bf16.gmra.mxu0 %v795
        %v885 = vpop.f32.mrf.mxu0
        %v886 = vadd.f32 %v825, %v885
        %v887 = vpop.f32.mrf.mxu0
        %v888 = vpop.f32.mrf.mxu0
        %v889 = vadd.f32 %v825, %v888
        %v890 = vpop.f32.mrf.mxu0
        %891 = vdwg.mxu0
        %v892 = vstv %s378
        %v893 = vmul.f32 %v862, %v892
        %v894 = vmul.f32 %v865, %v892
        %v895 = vadd.f32 %v893, 0.0
        %v896 = vadd.f32 %v894, 0.0
        %vm897 = vcmp.ge.f32.partialorder %v895, %v389
        %vm898 = vcmp.ge.f32.partialorder %v896, %v389
        %v899 = vsel %vm897, 1, 0
        %v900 = vsel %vm898, 1, 0
        %v901 = vcvt.s32.f32 %v899
        %v902 = vcvt.s32.f32 %v900
        %v903 = vsub.f32 1.0, %v901
        %v904 = vsub.f32 1.0, %v902
        %v905 = vmul.f32 %v895, %v903
        %v906 = vmul.f32 %v896, %v904
        %v907 = vadd.f32 %v901, 0.0
        %v908 = vadd.f32 %v902, 0.0
        %v909 = vsub.f32 %v870, %v905
        %v910 = vsub.f32 %v873, %v906
        %v911 = vmul.f32 %v909, %v892
        %v912 = vmul.f32 %v910, %v892
        %v913 = vadd.f32 %v905, %v911
        %v914 = vadd.f32 %v906, %v912
        %vm915 = vcmp.ge.f32.partialorder %v913, %v389
        %vm916 = vcmp.ge.f32.partialorder %v914, %v389
        %v917 = vsel %vm915, 1, 0
        %v918 = vsel %vm916, 1, 0
        %v919 = vcvt.s32.f32 %v917
        %v920 = vcvt.s32.f32 %v918
        %v921 = vsub.f32 1.0, %v919
        %v922 = vsub.f32 1.0, %v920
        %v923 = vmul.f32 %v913, %v921
        %v924 = vmul.f32 %v914, %v922
        %v925 = vadd.f32 %v907, %v919
        %v926 = vadd.f32 %v908, %v920
        %v927 = vsub.f32 %v878, %v923
        %v928 = vsub.f32 %v881, %v924
        %v929 = vmul.f32 %v927, %v892
        %v930 = vmul.f32 %v928, %v892
        %v931 = vadd.f32 %v923, %v929
        %v932 = vadd.f32 %v924, %v930
        %vm933 = vcmp.ge.f32.partialorder %v931, %v389
        %vm934 = vcmp.ge.f32.partialorder %v932, %v389
        %v935 = vsel %vm933, 1, 0
        %v936 = vsel %vm934, 1, 0
        %v937 = vcvt.s32.f32 %v935
        %v938 = vcvt.s32.f32 %v936
        %v939 = vsub.f32 1.0, %v937
        %v940 = vsub.f32 1.0, %v938
        %v941 = vmul.f32 %v931, %v939
        %v942 = vmul.f32 %v932, %v940
        %v943 = vadd.f32 %v925, %v937
        %v944 = vadd.f32 %v926, %v938
        %v945 = vsub.f32 %v886, %v941
        %v946 = vsub.f32 %v889, %v942
        %v947 = vmul.f32 %v945, %v892
        %v948 = vmul.f32 %v946, %v892
        %v949 = vadd.f32 %v941, %v947
        %v950 = vadd.f32 %v942, %v948
        %vm951 = vcmp.ge.f32.partialorder %v949, %v389
        %vm952 = vcmp.ge.f32.partialorder %v950, %v389
        %v953 = vsel %vm951, 1, 0
        %v954 = vsel %vm952, 1, 0
        %v955 = vcvt.s32.f32 %v953
        %v956 = vcvt.s32.f32 %v954
        %v957 = vadd.f32 %v943, %v955
        %v958 = vadd.f32 %v944, %v956
        %v959 = vmul.f32 %v957, 0.25
        %v960 = vmul.f32 %v958, 0.25
        %v961 = vpack.c.bf16 %v960, %v959
        %v962 = vld [vmem:[%s8] sm:$0xff]
        %v963 = vld [vmem:[%s8 + $0x8] sm:$0xff]
        %v964 = vld [vmem:[%s8 + $0x10] sm:$0xff]
        %v965 = vld [vmem:[%s8 + $0x18] sm:$0xff]
        %v966 = vld [vmem:[%s8 + $0x20] sm:$0xff]
        %v967 = vld [vmem:[%s8 + $0x28] sm:$0xff]
        %v968 = vld [vmem:[%s8 + $0x30] sm:$0xff]
        %v969 = vld [vmem:[%s8 + $0x38] sm:$0xff]
        %v970 = vld [vmem:[%s8 + $0x40] sm:$0xff]
        %v971 = vld [vmem:[%s8 + $0x48] sm:$0xff]
        %v972 = vld [vmem:[%s8 + $0x50] sm:$0xff]
        %v973 = vld [vmem:[%s8 + $0x58] sm:$0xff]
        %v974 = vld [vmem:[%s8 + $0x60] sm:$0xff]
        %v975 = vld [vmem:[%s8 + $0x68] sm:$0xff]
        %v976 = vld [vmem:[%s8 + $0x70] sm:$0xff]
        %v977 = vld [vmem:[%s8 + $0x78] sm:$0xff]
        %v978 = vpack.c.bf16 %v963, %v962
        %v979 = vpack.c.bf16 %v965, %v964
        %v980 = vpack.c.bf16 %v967, %v966
        %v981 = vpack.c.bf16 %v969, %v968
        %v982 = vpack.c.bf16 %v971, %v970
        %v983 = vpack.c.bf16 %v973, %v972
        %v984 = vpack.c.bf16 %v975, %v974
        %v985 = vpack.c.bf16 %v977, %v976
        %v986 = vld [vmem:[%s9] sm:$0x1]
        %v988 = vlaneseq
        %v989 = vshrl.u32 %v988, 7
        %v990 = vsub.s32 0, %v989
        %v991 = vrot.slane %v986, %v990
        %993 = vmatprep.subr.bf16.mxu0 0
        %994 = vmatpush1.bf16.msra.mxu0 %v985
        %995 = vmatprep.subr.bf16.mxu0 0
        %996 = vmatpush1.bf16.msra.mxu0 %v984
        %997 = vmatprep.subr.bf16.mxu0 0
        %998 = vmatpush1.bf16.msra.mxu0 %v983
        %999 = vmatprep.subr.bf16.mxu0 0
        %1000 = vmatpush1.bf16.msra.mxu0 %v982
        %1001 = vmatprep.subr.bf16.mxu0 0
        %1002 = vmatpush1.bf16.msra.mxu0 %v981
        %1003 = vmatprep.subr.bf16.mxu0 0
        %1004 = vmatpush1.bf16.msra.mxu0 %v980
        %1005 = vmatprep.subr.bf16.mxu0 0
        %1006 = vmatpush1.bf16.msra.mxu0 %v979
        %1007 = vmatprep.subr.bf16.mxu0 0
        %1008 = vmatpush1.bf16.msra.mxu0 %v978
        %1009 = vmatprep.subr.bf16.mxu0 0
        %1010 = vmatpush2.bf16.msra.mxu0 0
        %1011 = vmatprep.subr.bf16.mxu0 0
        %1012 = vmatpush2.bf16.msra.mxu0 0
        %1013 = vmatprep.subr.bf16.mxu0 0
        %1014 = vmatpush2.bf16.msra.mxu0 0
        %1015 = vmatprep.subr.bf16.mxu0 0
        %1016 = vmatpush2.bf16.msra.mxu0 0
        %1017 = vmatprep.subr.bf16.mxu0 0
        %1018 = vmatpush2.bf16.msra.mxu0 0
        %1019 = vmatprep.subr.bf16.mxu0 0
        %1020 = vmatpush2.bf16.msra.mxu0 0
        %1021 = vmatprep.subr.bf16.mxu0 0
        %1022 = vmatpush2.bf16.msra.mxu0 0
        %1023 = vmatprep.subr.bf16.mxu0 0
        %1024 = vmatpush2.bf16.msra.mxu0 0
        %1025 = vmatprep.mubr.bf16.mxu0 0
        %1026 = vmatmul.mubr.bf16.gmra.mxu0 %v961
        %v1027 = vpop.f32.mrf.mxu0
        %v1028 = vadd.f32 %v991, %v1027
        %v1029 = vpop.f32.mrf.mxu0
        %v1030 = vpop.f32.mrf.mxu0
        %v1031 = vadd.f32 %v991, %v1030
        %v1032 = vpop.f32.mrf.mxu0
        %1033 = vdwg.mxu0
        %v1034 = vlaneseq
        %v1035 = vand.u32 %v1034, 127
        %vm1036 = vcmp.lt.s32.totalorder %v1035, 4
        %v1037 = vxor.u32 %v1028, 2147483648
        %v1038 = vxor.u32 %v1031, 2147483648
        %v1039 = vmul.f32 %v1037, 1.442695
        %v1040 = vpow.pop %v1039
        %v1041 = vmul.f32 %v1038, 1.442695
        %v1042 = vpow.pop %v1041
        %v1043 = vadd.f32 %v1040, 1.0
        %v1044 = vadd.f32 %v1042, 1.0
        %v1045 = vrcp.pop %v1043
        %v1046 = vmul.f32 1.0, %v1045
        %v1047 = vrcp.pop %v1044
        %v1048 = vmul.f32 1.0, %v1047
        %v1049 = vsel %vm1036, %v603, %v1046
        %v1050 = vsel %vm1036, %v606, %v1048
        %1051 = vst [vmem:[%s373] sm:$0xff] %v1049
        %1052 = vst [vmem:[%s373 + $0x8] sm:$0xff] %v1050
        %p1053 = scmp.lt.s32.totalorder %s22, 1
        %s1054 = scalar_select %p1053, %s22, 1
        %s1055 = smul.addr %s1054, 2
        %s1056 = smul.addr %s1055, 8
        %s1057 = scalar_lea.vmem %s10, %s1056
        // Predicated region
        $region65: #{spiking_detr_forward.3} parent=59 // pred_check
          %p1058 = pneg %p255
        $region66: #{spiking_detr_forward.3} parent=59 // pred_check_branch
          %1060 = sbr.rel (%p1058) target = $region68
        $region67: #{spiking_detr_forward.3} parent=59 // pred_region
          _
        $region68: #{spiking_detr_forward.3} parent=59 // pred_fallthru
          _
      $region60: #{spiking_detr_forward.3} parent=5 // pred_fallthru
        _
      %p1061 = scmp.le.s32.totalorder 2, %s17
      // Predicated region
      $region69: #{spiking_detr_forward.3} parent=5 // pred_check
        %p1062 = pneg %p1061
      $region70: #{spiking_detr_forward.3} parent=5 // pred_check_branch
        %1064 = sbr.rel (%p1062) target = $region72
      $region71: #{spiking_detr_forward.3} parent=5 // pred_region
        %s1065 = ssub.s32 %s17, 2
        // Predicated region
        $region73: #{spiking_detr_forward.3} parent=71 // pred_check
          %p1066 = pneg %p261
        $region74: #{spiking_detr_forward.3} parent=71 // pred_check_branch
          %1068 = sbr.rel (%p1066) target = $region76
        $region75: #{spiking_detr_forward.3} parent=71 // pred_region
          %p1069 = scmp.lt.s32.totalorder %s23, 1
          %s1070 = scalar_select %p1069, %s23, 1
          %s1071 = smul.addr %s1070, 2
          %s1072 = smul.addr %s1071, 8
          %s1073 = scalar_lea.vmem %s10, %s1072
        $region76: #{spiking_detr_forward.3} parent=71 // pred_fallthru
          _
      $region72: #{spiking_detr_forward.3} parent=5 // pred_fallthru
        _
    $region6: #{spiking_detr_forward.3} parent=1 // loop_footer
      %s21 = sadd.s32 1, %s17
    $region7: #{spiking_detr_forward.3} parent=1 // loop_footer_branch
      %16 = sbr.rel target = $region3
    $region8: #{spiking_detr_forward.3} parent=1 // loop_exit
      _
    %1074 = vsyncpa [#allocation4], 1
    %s1075 = scalar_lea.sflag [#allocation4], 1
    %1076 = vsyncpa %s1075, 1

</llo_original>
